<compile_context>
chip_gen: v7x
topology: tpu7x:2x2x1
jax: 0.10.0
libtpu: 0.0.40
codegen_flags: <defaults>
</compile_context>

<pallas_src>
import functools

import jax
import jax.numpy as jnp
import numpy as np
from jax.experimental import pallas as pl
from jax.experimental.pallas import tpu as pltpu


def _sigmoid_1eup(x):
    # sigmoid(x) == 0.5 * (1 + tanh(0.5 * x)); single EUP transcendental.
    return 0.5 * (jnp.tanh(0.5 * x) + 1.0)


def _gru_last_kernel(x2_ref,
                     wih_rz_ref, wih_n_ref, b_rz_ref, b_in_ref,
                     whh_rz_ref, whh_n_ref, b_hn_ref,
                     wcls_ref, bcls_ref, out_ref,
                     *, seq_len, batch, hidden_dim):
    T, B, H = seq_len, batch, hidden_dim
    f32 = jnp.float32

    # ---- hoisted input projection for all timesteps (two clean matmuls) ----
    # x2_ref is time-major flattened: row t*B + b == x[b, t, :].
    x2 = x2_ref[...]                                            # (T*B, F)
    gx_rz_all = (jnp.dot(x2, wih_rz_ref[...], preferred_element_type=f32)
                 + b_rz_ref[...])                               # (T*B, 2H) incl. b_hr, b_hz
    gx_n_all = (jnp.dot(x2, wih_n_ref[...], preferred_element_type=f32)
                + b_in_ref[...])                                # (T*B, H)

    whh_rz = whh_rz_ref[...]                                    # (H, 2H)
    whh_n = whh_n_ref[...]                                      # (H, H)
    b_hn = jnp.broadcast_to(b_hn_ref[...], (B, H))              # hoisted broadcast

    # ------------------------- peeled t = 0 (h == 0) -------------------------
    rz = _sigmoid_1eup(gx_rz_all[0:B, :])
    r = rz[:, 0:H]
    z = rz[:, H:2 * H]
    n = jnp.tanh(gx_n_all[0:B, :] + r * b_hn)
    h = (1.0 - z) * n

    # ------------------------- remaining time steps --------------------------
    # T is a small compile-time constant -> fully unrolled, static slices.
    for t in range(1, T):
        # rz matmul issued first so its sigmoid overlaps the n-block drain.
        gh_rz = jnp.dot(h, whh_rz, preferred_element_type=f32)  # (B, 2H)
        gh_n = jnp.dot(h, whh_n, preferred_element_type=f32)    # (B, H)
        rz = _sigmoid_1eup(gx_rz_all[t * B:(t + 1) * B, :] + gh_rz)
        r = rz[:, 0:H]
        z = rz[:, H:2 * H]
        n = jnp.tanh(gx_n_all[t * B:(t + 1) * B, :] + r * (gh_n + b_hn))
        h = (1.0 - z) * n + z * h

    # --------------------------- fused classifier ----------------------------
    out = (jnp.dot(h, wcls_ref[...], preferred_element_type=f32)
           + bcls_ref[...])                                     # (B, O)
    out_ref[...] = out.astype(out_ref.dtype)


def square_model_gru_forward(x, params):
    """x: (B, T, F) float32 (batch_first, like the torch module) -> (B, n_outputs)."""
    B, T, F = x.shape
    H = params["whh"].shape[0]
    O = params["wcls"].shape[1]

    # Time-major flatten (layout plumbing): row t*B + b of x2d is x[b, t, :].
    x2d = jnp.transpose(x, (1, 0, 2)).reshape(T * B, F)

    # Host/wrapper-side weight splitting + bias constant folding:
    #   b_rz = b_ir,b_iz + b_hr,b_hz  (safe: r/z gates add both biases directly)
    #   b_hn stays separate (it sits inside the reset-gate multiplication).
    wih, bih = params["wih"], params["bih"]          # (F, 3H), (1, 3H)
    whh, bhh = params["whh"], params["bhh"]          # (H, 3H), (1, 3H)
    wih_rz, wih_n = wih[:, :2 * H], wih[:, 2 * H:]
    whh_rz, whh_n = whh[:, :2 * H], whh[:, 2 * H:]
    b_rz = bih[:, :2 * H] + bhh[:, :2 * H]
    b_in = bih[:, 2 * H:]
    b_hn = bhh[:, 2 * H:]

    kernel = functools.partial(_gru_last_kernel,
                               seq_len=T, batch=B, hidden_dim=H)
    vmem = pl.BlockSpec(memory_space=pltpu.MemorySpace.VMEM)

    return pl.pallas_call(
        kernel,
        out_shape=jax.ShapeDtypeStruct((B, O), jnp.float32),
        in_specs=[vmem] * 10,
        out_specs=vmem,
    )(x2d,
      wih_rz, wih_n, b_rz, b_in,
      whh_rz, whh_n, b_hn,
      params["wcls"], params["bcls"])


# ------------------------------ pure-numpy reference ------------------------------
def _np_sigmoid(v):
    return 1.0 / (1.0 + np.exp(-v))


def reference_forward(x, params):
    x = np.asarray(x)
    p = {k: np.asarray(v) for k, v in params.items()}
    B, T, F = x.shape
    H = p["whh"].shape[0]
    outs = []
    for b in range(B):
        h = np.zeros(H, np.float32)
        for t in range(T):
            gi = x[b, t] @ p["wih"] + p["bih"][0]
            gh = h @ p["whh"] + p["bhh"][0]
            r = _np_sigmoid(gi[0:H] + gh[0:H])
            z = _np_sigmoid(gi[H:2 * H] + gh[H:2 * H])
            n = np.tanh(gi[2 * H:3 * H] + r * gh[2 * H:3 * H])
            h = (1.0 - z) * n + z * h
        outs.append(h @ p["wcls"] + p["bcls"][0])
    return np.stack(outs)


if __name__ == "__main__":
    n_features, hidden_dim, n_outputs = 4, 32, 2
    B, T = 2, 8
    F, H, O = n_features, hidden_dim, n_outputs

    key = jax.random.PRNGKey(0)
    ks = jax.random.split(key, 8)
    bound = 1.0 / np.sqrt(H)
    u = lambda k, shape: jax.random.uniform(k, shape, jnp.float32, -bound, bound)

    # PyTorch stores weight_ih_l0 as (3H, F) and weight_hh_l0 as (3H, H) with
    # gate order (r, z, n); keep them pre-transposed here as (F, 3H) / (H, 3H).
    params = {
        "wih": u(ks[0], (F, 3 * H)),
        "bih": u(ks[1], (1, 3 * H)),
        "whh": u(ks[2], (H, 3 * H)),
        "bhh": u(ks[3], (1, 3 * H)),
        "wcls": u(ks[4], (H, O)),
        "bcls": u(ks[5], (1, O)),
    }

    x = jax.random.normal(ks[6], (B, T, F), jnp.float32)

    out = square_model_gru_forward(x, params)
    out = jax.block_until_ready(out)

    ref = reference_forward(x, params)
    np.testing.assert_allclose(np.asarray(out), ref, rtol=1e-4, atol=1e-4)

    assert out.shape == (B, O)
    print("KERNEL_OK")
</pallas_src>

<mosaic_0001>
module attributes {stable_mosaic.version = 11 : i64} {
  func.func @_gru_last_kernel(%arg0: memref<16x4xf32, #tpu.memory_space<vmem>>, %arg1: memref<4x64xf32, #tpu.memory_space<vmem>>, %arg2: memref<4x32xf32, #tpu.memory_space<vmem>>, %arg3: memref<1x64xf32, #tpu.memory_space<vmem>>, %arg4: memref<1x32xf32, #tpu.memory_space<vmem>>, %arg5: memref<32x64xf32, #tpu.memory_space<vmem>>, %arg6: memref<32x32xf32, #tpu.memory_space<vmem>>, %arg7: memref<1x32xf32, #tpu.memory_space<vmem>>, %arg8: memref<32x2xf32, #tpu.memory_space<vmem>>, %arg9: memref<1x2xf32, #tpu.memory_space<vmem>>, %arg10: memref<2x2xf32, #tpu.memory_space<vmem>>) attributes {dimension_semantics = [], scalar_prefetch = 0 : i64, scratch_operands = 0 : i64, tpu.core_type = #tpu.core_type<tc>} {
    %c0 = arith.constant 0 : index
    %c0_0 = arith.constant 0 : index
    %0 = vector.load %arg0[%c0, %c0_0] : memref<16x4xf32, #tpu.memory_space<vmem>>, vector<16x4xf32>
    %c0_1 = arith.constant 0 : index
    %c0_2 = arith.constant 0 : index
    %1 = vector.load %arg1[%c0_1, %c0_2] : memref<4x64xf32, #tpu.memory_space<vmem>>, vector<4x64xf32>
    %cst = arith.constant dense<0.000000e+00> : vector<16x64xf32>
    %2 = tpu.matmul %0, %1, %cst {dimension_numbers = #tpu.dot_dimension_numbers<[1], [0], [0], [1], [0, 0, 1, 1], [], []>} : vector<16x4xf32>, vector<4x64xf32>, vector<16x64xf32> -> vector<16x64xf32>
    %c0_3 = arith.constant 0 : index
    %c0_4 = arith.constant 0 : index
    %3 = vector.load %arg3[%c0_3, %c0_4] : memref<1x64xf32, #tpu.memory_space<vmem>>, vector<1x64xf32>
    %4 = vector.broadcast %3 : vector<1x64xf32> to vector<16x64xf32>
    %5 = arith.addf %2, %4 : vector<16x64xf32>
    %c0_5 = arith.constant 0 : index
    %c0_6 = arith.constant 0 : index
    %6 = vector.load %arg2[%c0_5, %c0_6] : memref<4x32xf32, #tpu.memory_space<vmem>>, vector<4x32xf32>
    %cst_7 = arith.constant dense<0.000000e+00> : vector<16x32xf32>
    %7 = tpu.matmul %0, %6, %cst_7 {dimension_numbers = #tpu.dot_dimension_numbers<[1], [0], [0], [1], [0, 0, 1, 1], [], []>} : vector<16x4xf32>, vector<4x32xf32>, vector<16x32xf32> -> vector<16x32xf32>
    %c0_8 = arith.constant 0 : index
    %c0_9 = arith.constant 0 : index
    %8 = vector.load %arg4[%c0_8, %c0_9] : memref<1x32xf32, #tpu.memory_space<vmem>>, vector<1x32xf32>
    %9 = vector.broadcast %8 : vector<1x32xf32> to vector<16x32xf32>
    %10 = arith.addf %7, %9 : vector<16x32xf32>
    %c0_10 = arith.constant 0 : index
    %c0_11 = arith.constant 0 : index
    %11 = vector.load %arg5[%c0_10, %c0_11] : memref<32x64xf32, #tpu.memory_space<vmem>>, vector<32x64xf32>
    %c0_12 = arith.constant 0 : index
    %c0_13 = arith.constant 0 : index
    %12 = vector.load %arg6[%c0_12, %c0_13] : memref<32x32xf32, #tpu.memory_space<vmem>>, vector<32x32xf32>
    %c0_14 = arith.constant 0 : index
    %c0_15 = arith.constant 0 : index
    %13 = vector.load %arg7[%c0_14, %c0_15] : memref<1x32xf32, #tpu.memory_space<vmem>>, vector<1x32xf32>
    %14 = vector.shape_cast %13 : vector<1x32xf32> to vector<1x32xf32>
    %15 = vector.broadcast %14 : vector<1x32xf32> to vector<2x32xf32>
    %16 = vector.extract_strided_slice %5 {offsets = [0, 0], sizes = [2, 64], strides = [1, 1]} : vector<16x64xf32> to vector<2x64xf32>
    %cst_16 = arith.constant 5.000000e-01 : f32
    %17 = vector.broadcast %cst_16 : f32 to vector<2x64xf32>
    %18 = arith.mulf %17, %16 : vector<2x64xf32>
    %19 = math.tanh %18 : vector<2x64xf32>
    %cst_17 = arith.constant 1.000000e+00 : f32
    %20 = vector.broadcast %cst_17 : f32 to vector<2x64xf32>
    %21 = arith.addf %19, %20 : vector<2x64xf32>
    %cst_18 = arith.constant 5.000000e-01 : f32
    %22 = vector.broadcast %cst_18 : f32 to vector<2x64xf32>
    %23 = arith.mulf %22, %21 : vector<2x64xf32>
    %24 = vector.extract_strided_slice %23 {offsets = [0, 0], sizes = [2, 32], strides = [1, 1]} : vector<2x64xf32> to vector<2x32xf32>
    %25 = vector.extract_strided_slice %23 {offsets = [0, 32], sizes = [2, 32], strides = [1, 1]} : vector<2x64xf32> to vector<2x32xf32>
    %26 = vector.extract_strided_slice %10 {offsets = [0, 0], sizes = [2, 32], strides = [1, 1]} : vector<16x32xf32> to vector<2x32xf32>
    %27 = arith.mulf %24, %15 : vector<2x32xf32>
    %28 = arith.addf %26, %27 : vector<2x32xf32>
    %29 = math.tanh %28 : vector<2x32xf32>
    %cst_19 = arith.constant 1.000000e+00 : f32
    %30 = vector.broadcast %cst_19 : f32 to vector<2x32xf32>
    %31 = arith.subf %30, %25 : vector<2x32xf32>
    %32 = arith.mulf %31, %29 : vector<2x32xf32>
    %cst_20 = arith.constant dense<0.000000e+00> : vector<2x64xf32>
    %33 = tpu.matmul %32, %11, %cst_20 {dimension_numbers = #tpu.dot_dimension_numbers<[1], [0], [0], [1], [0, 0, 1, 1], [], []>} : vector<2x32xf32>, vector<32x64xf32>, vector<2x64xf32> -> vector<2x64xf32>
    %cst_21 = arith.constant dense<0.000000e+00> : vector<2x32xf32>
    %34 = tpu.matmul %32, %12, %cst_21 {dimension_numbers = #tpu.dot_dimension_numbers<[1], [0], [0], [1], [0, 0, 1, 1], [], []>} : vector<2x32xf32>, vector<32x32xf32>, vector<2x32xf32> -> vector<2x32xf32>
    %35 = vector.extract_strided_slice %5 {offsets = [2, 0], sizes = [2, 64], strides = [1, 1]} : vector<16x64xf32> to vector<2x64xf32>
    %36 = arith.addf %35, %33 : vector<2x64xf32>
    %cst_22 = arith.constant 5.000000e-01 : f32
    %37 = vector.broadcast %cst_22 : f32 to vector<2x64xf32>
    %38 = arith.mulf %37, %36 : vector<2x64xf32>
    %39 = math.tanh %38 : vector<2x64xf32>
    %cst_23 = arith.constant 1.000000e+00 : f32
    %40 = vector.broadcast %cst_23 : f32 to vector<2x64xf32>
    %41 = arith.addf %39, %40 : vector<2x64xf32>
    %cst_24 = arith.constant 5.000000e-01 : f32
    %42 = vector.broadcast %cst_24 : f32 to vector<2x64xf32>
    %43 = arith.mulf %42, %41 : vector<2x64xf32>
    %44 = vector.extract_strided_slice %43 {offsets = [0, 0], sizes = [2, 32], strides = [1, 1]} : vector<2x64xf32> to vector<2x32xf32>
    %45 = vector.extract_strided_slice %43 {offsets = [0, 32], sizes = [2, 32], strides = [1, 1]} : vector<2x64xf32> to vector<2x32xf32>
    %46 = vector.extract_strided_slice %10 {offsets = [2, 0], sizes = [2, 32], strides = [1, 1]} : vector<16x32xf32> to vector<2x32xf32>
    %47 = arith.addf %34, %15 : vector<2x32xf32>
    %48 = arith.mulf %44, %47 : vector<2x32xf32>
    %49 = arith.addf %46, %48 : vector<2x32xf32>
    %50 = math.tanh %49 : vector<2x32xf32>
    %cst_25 = arith.constant 1.000000e+00 : f32
    %51 = vector.broadcast %cst_25 : f32 to vector<2x32xf32>
    %52 = arith.subf %51, %45 : vector<2x32xf32>
    %53 = arith.mulf %52, %50 : vector<2x32xf32>
    %54 = arith.mulf %45, %32 : vector<2x32xf32>
    %55 = arith.addf %53, %54 : vector<2x32xf32>
    %cst_26 = arith.constant dense<0.000000e+00> : vector<2x64xf32>
    %56 = tpu.matmul %55, %11, %cst_26 {dimension_numbers = #tpu.dot_dimension_numbers<[1], [0], [0], [1], [0, 0, 1, 1], [], []>} : vector<2x32xf32>, vector<32x64xf32>, vector<2x64xf32> -> vector<2x64xf32>
    %cst_27 = arith.constant dense<0.000000e+00> : vector<2x32xf32>
    %57 = tpu.matmul %55, %12, %cst_27 {dimension_numbers = #tpu.dot_dimension_numbers<[1], [0], [0], [1], [0, 0, 1, 1], [], []>} : vector<2x32xf32>, vector<32x32xf32>, vector<2x32xf32> -> vector<2x32xf32>
    %58 = vector.extract_strided_slice %5 {offsets = [4, 0], sizes = [2, 64], strides = [1, 1]} : vector<16x64xf32> to vector<2x64xf32>
    %59 = arith.addf %58, %56 : vector<2x64xf32>
    %cst_28 = arith.constant 5.000000e-01 : f32
    %60 = vector.broadcast %cst_28 : f32 to vector<2x64xf32>
    %61 = arith.mulf %60, %59 : vector<2x64xf32>
    %62 = math.tanh %61 : vector<2x64xf32>
    %cst_29 = arith.constant 1.000000e+00 : f32
    %63 = vector.broadcast %cst_29 : f32 to vector<2x64xf32>
    %64 = arith.addf %62, %63 : vector<2x64xf32>
    %cst_30 = arith.constant 5.000000e-01 : f32
    %65 = vector.broadcast %cst_30 : f32 to vector<2x64xf32>
    %66 = arith.mulf %65, %64 : vector<2x64xf32>
    %67 = vector.extract_strided_slice %66 {offsets = [0, 0], sizes = [2, 32], strides = [1, 1]} : vector<2x64xf32> to vector<2x32xf32>
    %68 = vector.extract_strided_slice %66 {offsets = [0, 32], sizes = [2, 32], strides = [1, 1]} : vector<2x64xf32> to vector<2x32xf32>
    %69 = vector.extract_strided_slice %10 {offsets = [4, 0], sizes = [2, 32], strides = [1, 1]} : vector<16x32xf32> to vector<2x32xf32>
    %70 = arith.addf %57, %15 : vector<2x32xf32>
    %71 = arith.mulf %67, %70 : vector<2x32xf32>
    %72 = arith.addf %69, %71 : vector<2x32xf32>
    %73 = math.tanh %72 : vector<2x32xf32>
    %cst_31 = arith.constant 1.000000e+00 : f32
    %74 = vector.broadcast %cst_31 : f32 to vector<2x32xf32>
    %75 = arith.subf %74, %68 : vector<2x32xf32>
    %76 = arith.mulf %75, %73 : vector<2x32xf32>
    %77 = arith.mulf %68, %55 : vector<2x32xf32>
    %78 = arith.addf %76, %77 : vector<2x32xf32>
    %cst_32 = arith.constant dense<0.000000e+00> : vector<2x64xf32>
    %79 = tpu.matmul %78, %11, %cst_32 {dimension_numbers = #tpu.dot_dimension_numbers<[1], [0], [0], [1], [0, 0, 1, 1], [], []>} : vector<2x32xf32>, vector<32x64xf32>, vector<2x64xf32> -> vector<2x64xf32>
    %cst_33 = arith.constant dense<0.000000e+00> : vector<2x32xf32>
    %80 = tpu.matmul %78, %12, %cst_33 {dimension_numbers = #tpu.dot_dimension_numbers<[1], [0], [0], [1], [0, 0, 1, 1], [], []>} : vector<2x32xf32>, vector<32x32xf32>, vector<2x32xf32> -> vector<2x32xf32>
    %81 = vector.extract_strided_slice %5 {offsets = [6, 0], sizes = [2, 64], strides = [1, 1]} : vector<16x64xf32> to vector<2x64xf32>
    %82 = arith.addf %81, %79 : vector<2x64xf32>
    %cst_34 = arith.constant 5.000000e-01 : f32
    %83 = vector.broadcast %cst_34 : f32 to vector<2x64xf32>
    %84 = arith.mulf %83, %82 : vector<2x64xf32>
    %85 = math.tanh %84 : vector<2x64xf32>
    %cst_35 = arith.constant 1.000000e+00 : f32
    %86 = vector.broadcast %cst_35 : f32 to vector<2x64xf32>
    %87 = arith.addf %85, %86 : vector<2x64xf32>
    %cst_36 = arith.constant 5.000000e-01 : f32
    %88 = vector.broadcast %cst_36 : f32 to vector<2x64xf32>
    %89 = arith.mulf %88, %87 : vector<2x64xf32>
    %90 = vector.extract_strided_slice %89 {offsets = [0, 0], sizes = [2, 32], strides = [1, 1]} : vector<2x64xf32> to vector<2x32xf32>
    %91 = vector.extract_strided_slice %89 {offsets = [0, 32], sizes = [2, 32], strides = [1, 1]} : vector<2x64xf32> to vector<2x32xf32>
    %92 = vector.extract_strided_slice %10 {offsets = [6, 0], sizes = [2, 32], strides = [1, 1]} : vector<16x32xf32> to vector<2x32xf32>
    %93 = arith.addf %80, %15 : vector<2x32xf32>
    %94 = arith.mulf %90, %93 : vector<2x32xf32>
    %95 = arith.addf %92, %94 : vector<2x32xf32>
    %96 = math.tanh %95 : vector<2x32xf32>
    %cst_37 = arith.constant 1.000000e+00 : f32
    %97 = vector.broadcast %cst_37 : f32 to vector<2x32xf32>
    %98 = arith.subf %97, %91 : vector<2x32xf32>
    %99 = arith.mulf %98, %96 : vector<2x32xf32>
    %100 = arith.mulf %91, %78 : vector<2x32xf32>
    %101 = arith.addf %99, %100 : vector<2x32xf32>
    %cst_38 = arith.constant dense<0.000000e+00> : vector<2x64xf32>
    %102 = tpu.matmul %101, %11, %cst_38 {dimension_numbers = #tpu.dot_dimension_numbers<[1], [0], [0], [1], [0, 0, 1, 1], [], []>} : vector<2x32xf32>, vector<32x64xf32>, vector<2x64xf32> -> vector<2x64xf32>
    %cst_39 = arith.constant dense<0.000000e+00> : vector<2x32xf32>
    %103 = tpu.matmul %101, %12, %cst_39 {dimension_numbers = #tpu.dot_dimension_numbers<[1], [0], [0], [1], [0, 0, 1, 1], [], []>} : vector<2x32xf32>, vector<32x32xf32>, vector<2x32xf32> -> vector<2x32xf32>
    %104 = vector.extract_strided_slice %5 {offsets = [8, 0], sizes = [2, 64], strides = [1, 1]} : vector<16x64xf32> to vector<2x64xf32>
    %105 = arith.addf %104, %102 : vector<2x64xf32>
    %cst_40 = arith.constant 5.000000e-01 : f32
    %106 = vector.broadcast %cst_40 : f32 to vector<2x64xf32>
    %107 = arith.mulf %106, %105 : vector<2x64xf32>
    %108 = math.tanh %107 : vector<2x64xf32>
    %cst_41 = arith.constant 1.000000e+00 : f32
    %109 = vector.broadcast %cst_41 : f32 to vector<2x64xf32>
    %110 = arith.addf %108, %109 : vector<2x64xf32>
    %cst_42 = arith.constant 5.000000e-01 : f32
    %111 = vector.broadcast %cst_42 : f32 to vector<2x64xf32>
    %112 = arith.mulf %111, %110 : vector<2x64xf32>
    %113 = vector.extract_strided_slice %112 {offsets = [0, 0], sizes = [2, 32], strides = [1, 1]} : vector<2x64xf32> to vector<2x32xf32>
    %114 = vector.extract_strided_slice %112 {offsets = [0, 32], sizes = [2, 32], strides = [1, 1]} : vector<2x64xf32> to vector<2x32xf32>
    %115 = vector.extract_strided_slice %10 {offsets = [8, 0], sizes = [2, 32], strides = [1, 1]} : vector<16x32xf32> to vector<2x32xf32>
    %116 = arith.addf %103, %15 : vector<2x32xf32>
    %117 = arith.mulf %113, %116 : vector<2x32xf32>
    %118 = arith.addf %115, %117 : vector<2x32xf32>
    %119 = math.tanh %118 : vector<2x32xf32>
    %cst_43 = arith.constant 1.000000e+00 : f32
    %120 = vector.broadcast %cst_43 : f32 to vector<2x32xf32>
    %121 = arith.subf %120, %114 : vector<2x32xf32>
    %122 = arith.mulf %121, %119 : vector<2x32xf32>
    %123 = arith.mulf %114, %101 : vector<2x32xf32>
    %124 = arith.addf %122, %123 : vector<2x32xf32>
    %cst_44 = arith.constant dense<0.000000e+00> : vector<2x64xf32>
    %125 = tpu.matmul %124, %11, %cst_44 {dimension_numbers = #tpu.dot_dimension_numbers<[1], [0], [0], [1], [0, 0, 1, 1], [], []>} : vector<2x32xf32>, vector<32x64xf32>, vector<2x64xf32> -> vector<2x64xf32>
    %cst_45 = arith.constant dense<0.000000e+00> : vector<2x32xf32>
    %126 = tpu.matmul %124, %12, %cst_45 {dimension_numbers = #tpu.dot_dimension_numbers<[1], [0], [0], [1], [0, 0, 1, 1], [], []>} : vector<2x32xf32>, vector<32x32xf32>, vector<2x32xf32> -> vector<2x32xf32>
    %127 = vector.extract_strided_slice %5 {offsets = [10, 0], sizes = [2, 64], strides = [1, 1]} : vector<16x64xf32> to vector<2x64xf32>
    %128 = arith.addf %127, %125 : vector<2x64xf32>
    %cst_46 = arith.constant 5.000000e-01 : f32
    %129 = vector.broadcast %cst_46 : f32 to vector<2x64xf32>
    %130 = arith.mulf %129, %128 : vector<2x64xf32>
    %131 = math.tanh %130 : vector<2x64xf32>
    %cst_47 = arith.constant 1.000000e+00 : f32
    %132 = vector.broadcast %cst_47 : f32 to vector<2x64xf32>
    %133 = arith.addf %131, %132 : vector<2x64xf32>
    %cst_48 = arith.constant 5.000000e-01 : f32
    %134 = vector.broadcast %cst_48 : f32 to vector<2x64xf32>
    %135 = arith.mulf %134, %133 : vector<2x64xf32>
    %136 = vector.extract_strided_slice %135 {offsets = [0, 0], sizes = [2, 32], strides = [1, 1]} : vector<2x64xf32> to vector<2x32xf32>
    %137 = vector.extract_strided_slice %135 {offsets = [0, 32], sizes = [2, 32], strides = [1, 1]} : vector<2x64xf32> to vector<2x32xf32>
    %138 = vector.extract_strided_slice %10 {offsets = [10, 0], sizes = [2, 32], strides = [1, 1]} : vector<16x32xf32> to vector<2x32xf32>
    %139 = arith.addf %126, %15 : vector<2x32xf32>
    %140 = arith.mulf %136, %139 : vector<2x32xf32>
    %141 = arith.addf %138, %140 : vector<2x32xf32>
    %142 = math.tanh %141 : vector<2x32xf32>
    %cst_49 = arith.constant 1.000000e+00 : f32
    %143 = vector.broadcast %cst_49 : f32 to vector<2x32xf32>
    %144 = arith.subf %143, %137 : vector<2x32xf32>
    %145 = arith.mulf %144, %142 : vector<2x32xf32>
    %146 = arith.mulf %137, %124 : vector<2x32xf32>
    %147 = arith.addf %145, %146 : vector<2x32xf32>
    %cst_50 = arith.constant dense<0.000000e+00> : vector<2x64xf32>
    %148 = tpu.matmul %147, %11, %cst_50 {dimension_numbers = #tpu.dot_dimension_numbers<[1], [0], [0], [1], [0, 0, 1, 1], [], []>} : vector<2x32xf32>, vector<32x64xf32>, vector<2x64xf32> -> vector<2x64xf32>
    %cst_51 = arith.constant dense<0.000000e+00> : vector<2x32xf32>
    %149 = tpu.matmul %147, %12, %cst_51 {dimension_numbers = #tpu.dot_dimension_numbers<[1], [0], [0], [1], [0, 0, 1, 1], [], []>} : vector<2x32xf32>, vector<32x32xf32>, vector<2x32xf32> -> vector<2x32xf32>
    %150 = vector.extract_strided_slice %5 {offsets = [12, 0], sizes = [2, 64], strides = [1, 1]} : vector<16x64xf32> to vector<2x64xf32>
    %151 = arith.addf %150, %148 : vector<2x64xf32>
    %cst_52 = arith.constant 5.000000e-01 : f32
    %152 = vector.broadcast %cst_52 : f32 to vector<2x64xf32>
    %153 = arith.mulf %152, %151 : vector<2x64xf32>
    %154 = math.tanh %153 : vector<2x64xf32>
    %cst_53 = arith.constant 1.000000e+00 : f32
    %155 = vector.broadcast %cst_53 : f32 to vector<2x64xf32>
    %156 = arith.addf %154, %155 : vector<2x64xf32>
    %cst_54 = arith.constant 5.000000e-01 : f32
    %157 = vector.broadcast %cst_54 : f32 to vector<2x64xf32>
    %158 = arith.mulf %157, %156 : vector<2x64xf32>
    %159 = vector.extract_strided_slice %158 {offsets = [0, 0], sizes = [2, 32], strides = [1, 1]} : vector<2x64xf32> to vector<2x32xf32>
    %160 = vector.extract_strided_slice %158 {offsets = [0, 32], sizes = [2, 32], strides = [1, 1]} : vector<2x64xf32> to vector<2x32xf32>
    %161 = vector.extract_strided_slice %10 {offsets = [12, 0], sizes = [2, 32], strides = [1, 1]} : vector<16x32xf32> to vector<2x32xf32>
    %162 = arith.addf %149, %15 : vector<2x32xf32>
    %163 = arith.mulf %159, %162 : vector<2x32xf32>
    %164 = arith.addf %161, %163 : vector<2x32xf32>
    %165 = math.tanh %164 : vector<2x32xf32>
    %cst_55 = arith.constant 1.000000e+00 : f32
    %166 = vector.broadcast %cst_55 : f32 to vector<2x32xf32>
    %167 = arith.subf %166, %160 : vector<2x32xf32>
    %168 = arith.mulf %167, %165 : vector<2x32xf32>
    %169 = arith.mulf %160, %147 : vector<2x32xf32>
    %170 = arith.addf %168, %169 : vector<2x32xf32>
    %cst_56 = arith.constant dense<0.000000e+00> : vector<2x64xf32>
    %171 = tpu.matmul %170, %11, %cst_56 {dimension_numbers = #tpu.dot_dimension_numbers<[1], [0], [0], [1], [0, 0, 1, 1], [], []>} : vector<2x32xf32>, vector<32x64xf32>, vector<2x64xf32> -> vector<2x64xf32>
    %cst_57 = arith.constant dense<0.000000e+00> : vector<2x32xf32>
    %172 = tpu.matmul %170, %12, %cst_57 {dimension_numbers = #tpu.dot_dimension_numbers<[1], [0], [0], [1], [0, 0, 1, 1], [], []>} : vector<2x32xf32>, vector<32x32xf32>, vector<2x32xf32> -> vector<2x32xf32>
    %173 = vector.extract_strided_slice %5 {offsets = [14, 0], sizes = [2, 64], strides = [1, 1]} : vector<16x64xf32> to vector<2x64xf32>
    %174 = arith.addf %173, %171 : vector<2x64xf32>
    %cst_58 = arith.constant 5.000000e-01 : f32
    %175 = vector.broadcast %cst_58 : f32 to vector<2x64xf32>
    %176 = arith.mulf %175, %174 : vector<2x64xf32>
    %177 = math.tanh %176 : vector<2x64xf32>
    %cst_59 = arith.constant 1.000000e+00 : f32
    %178 = vector.broadcast %cst_59 : f32 to vector<2x64xf32>
    %179 = arith.addf %177, %178 : vector<2x64xf32>
    %cst_60 = arith.constant 5.000000e-01 : f32
    %180 = vector.broadcast %cst_60 : f32 to vector<2x64xf32>
    %181 = arith.mulf %180, %179 : vector<2x64xf32>
    %182 = vector.extract_strided_slice %181 {offsets = [0, 0], sizes = [2, 32], strides = [1, 1]} : vector<2x64xf32> to vector<2x32xf32>
    %183 = vector.extract_strided_slice %181 {offsets = [0, 32], sizes = [2, 32], strides = [1, 1]} : vector<2x64xf32> to vector<2x32xf32>
    %184 = vector.extract_strided_slice %10 {offsets = [14, 0], sizes = [2, 32], strides = [1, 1]} : vector<16x32xf32> to vector<2x32xf32>
    %185 = arith.addf %172, %15 : vector<2x32xf32>
    %186 = arith.mulf %182, %185 : vector<2x32xf32>
    %187 = arith.addf %184, %186 : vector<2x32xf32>
    %188 = math.tanh %187 : vector<2x32xf32>
    %cst_61 = arith.constant 1.000000e+00 : f32
    %189 = vector.broadcast %cst_61 : f32 to vector<2x32xf32>
    %190 = arith.subf %189, %183 : vector<2x32xf32>
    %191 = arith.mulf %190, %188 : vector<2x32xf32>
    %192 = arith.mulf %183, %170 : vector<2x32xf32>
    %193 = arith.addf %191, %192 : vector<2x32xf32>
    %c0_62 = arith.constant 0 : index
    %c0_63 = arith.constant 0 : index
    %194 = vector.load %arg8[%c0_62, %c0_63] : memref<32x2xf32, #tpu.memory_space<vmem>>, vector<32x2xf32>
    %cst_64 = arith.constant dense<0.000000e+00> : vector<2x2xf32>
    %195 = tpu.matmul %193, %194, %cst_64 {dimension_numbers = #tpu.dot_dimension_numbers<[1], [0], [0], [1], [0, 0, 1, 1], [], []>} : vector<2x32xf32>, vector<32x2xf32>, vector<2x2xf32> -> vector<2x2xf32>
    %c0_65 = arith.constant 0 : index
    %c0_66 = arith.constant 0 : index
    %196 = vector.load %arg9[%c0_65, %c0_66] : memref<1x2xf32, #tpu.memory_space<vmem>>, vector<1x2xf32>
    %197 = vector.broadcast %196 : vector<1x2xf32> to vector<2x2xf32>
    %198 = arith.addf %195, %197 : vector<2x2xf32>
    %c0_67 = arith.constant 0 : index
    %c0_68 = arith.constant 0 : index
    %199 = vector.load %arg10[%c0_67, %c0_68] : memref<2x2xf32, #tpu.memory_space<vmem>>, vector<2x2xf32>
    tpu.vector_store %arg10[%c0_67, %c0_68], %198 {strides = array<i32>} : memref<2x2xf32, #tpu.memory_space<vmem>>, vector<2x2xf32>,
    return
  }
}

</mosaic_0001>

<llo_original>
// kernel: tpu_custom_call.1
$region0: #{tpu_custom_call.1}
  #allocation0 [shape = 'u32[]', space=smem, size = 0x4, offset = 0x4, fixed_abs, tag = 'smem constant byte address 0x4 - core index']
  #allocation1 [shape = 'u32[144,128]{1,0:T(1,128)}', space=vmem, size = 0x12000, scoped, tag = 'internal scratch']
  %s0 = inlined_call_operand.vmem [shape: f32[16,4], index: 0, kind: input, shape index: {}]
  %s1 = inlined_call_operand.hbm [shape: f32[4,64], index: 1, kind: input, shape index: {}]
  %s2 = inlined_call_operand.hbm [shape: f32[4,32], index: 2, kind: input, shape index: {}]
  %s3 = inlined_call_operand.vmem [shape: f32[1,64], index: 3, kind: input, shape index: {}]
  %s4 = inlined_call_operand.vmem [shape: f32[1,32], index: 4, kind: input, shape index: {}]
  %s5 = inlined_call_operand.vmem [shape: f32[32,64], index: 5, kind: input, shape index: {}]
  %s6 = inlined_call_operand.vmem [shape: f32[32,32], index: 6, kind: input, shape index: {}]
  %s7 = inlined_call_operand.vmem [shape: f32[1,32], index: 7, kind: input, shape index: {}]
  %s8 = inlined_call_operand.vmem [shape: f32[32,2], index: 8, kind: input, shape index: {}]
  %s9 = inlined_call_operand.vmem [shape: f32[1,2], index: 9, kind: input, shape index: {}]
  %s10 = inlined_call_operand.hbm [shape: f32[2,2], index: 10, kind: output, shape index: {}]
  %s11 = sld [smem:[#allocation0]]
  $region58: #{tpu_custom_call.1} parent=0
    _
  %s13 = ssub.s32 1, %s11
  %s14 = scalar_select 0, %s13, %s11
  $region1: #{tpu_custom_call.1} parent=0
    #allocation2 [shape = 'u8[2048]{0}', space=vmem, size = 0x800, scoped, tag = 'input window, operand 1, single buffered']
    #allocation3 [shape = 's32[1]{0}', space=sflag, size = 0x4, scoped, tag = 'scoped memory for tpu_custom_call.1']
    #allocation4 [shape = 's32[1]{0}', space=sflag, size = 0x4, scoped, tag = 'scoped memory for tpu_custom_call.1']
    #allocation5 [shape = 'u8[2048]{0}', space=vmem, size = 0x800, scoped, tag = 'input window, operand 2, single buffered']
    #allocation6 [shape = 's32[1]{0}', space=sflag, size = 0x4, scoped, tag = 'scoped memory for tpu_custom_call.1']
    #allocation7 [shape = 'u8[1024]{0}', space=vmem, size = 0x400, scoped, tag = 'output window, operand 0, single buffered']
    %15 = vsyncpa [#allocation3], 0
    %16 = vsyncpa [#allocation6], 0
    %17 = vsyncpa [#allocation4], 0
    // Predicated region
    $region2: #{tpu_custom_call.1} parent=1 // pred_check
      _
    $region3: #{tpu_custom_call.1} parent=1 // pred_check_branch
      %19 = sbr.rel (0) target = $region5
    $region4: #{tpu_custom_call.1} parent=1 // pred_region
      _
    $region5: #{tpu_custom_call.1} parent=1 // pred_fallthru
      _
    // Predicated region
    $region6: #{tpu_custom_call.1} parent=1 // pred_check
      _
    $region7: #{tpu_custom_call.1} parent=1 // pred_check_branch
      %21 = sbr.rel (0) target = $region9
    $region8: #{tpu_custom_call.1} parent=1 // pred_region
      %s23 = ssub.s32 64, 64
      %24 = vsyncadd [#allocation3], %s23
      %s26 = sshll.u32 [#allocation2], 4
      %s27 = int_to_ptr.vmem [resolvable:$true] %s26
      %29 = dma.hbm_to_vmem [thread:$0]  %s1, 64, %s27, [#allocation3]
    $region9: #{tpu_custom_call.1} parent=1 // pred_fallthru
      _
    // Predicated region
    $region10: #{tpu_custom_call.1} parent=1 // pred_check
      _
    $region11: #{tpu_custom_call.1} parent=1 // pred_check_branch
      %31 = sbr.rel (0) target = $region13
    $region12: #{tpu_custom_call.1} parent=1 // pred_region
      %s33 = ssub.s32 64, 64
      %34 = vsyncadd [#allocation6], %s33
      %s36 = sshll.u32 [#allocation5], 4
      %s37 = int_to_ptr.vmem [resolvable:$true] %s36
      %39 = dma.hbm_to_vmem [thread:$0]  %s2, 64, %s37, [#allocation6]
    $region13: #{tpu_custom_call.1} parent=1 // pred_fallthru
      _
    // Predicated region
    $region14: #{tpu_custom_call.1} parent=1 // pred_check
      _
    $region15: #{tpu_custom_call.1} parent=1 // pred_check_branch
      %41 = sbr.rel (0) target = $region17
    $region16: #{tpu_custom_call.1} parent=1 // pred_region
      _
    $region17: #{tpu_custom_call.1} parent=1 // pred_fallthru
      _
    // Predicated region
    $region18: #{tpu_custom_call.1} parent=1 // pred_check
      _
    $region19: #{tpu_custom_call.1} parent=1 // pred_check_branch
      %43 = sbr.rel (0) target = $region21
    $region20: #{tpu_custom_call.1} parent=1 // pred_region
      _
    $region21: #{tpu_custom_call.1} parent=1 // pred_fallthru
      _
    // Predicated region
    $region22: #{tpu_custom_call.1} parent=1 // pred_check
      _
    $region23: #{tpu_custom_call.1} parent=1 // pred_check_branch
      %45 = sbr.rel (0) target = $region25
    $region24: #{tpu_custom_call.1} parent=1 // pred_region
      _
    $region25: #{tpu_custom_call.1} parent=1 // pred_fallthru
      _
    // Predicated region
    $region26: #{tpu_custom_call.1} parent=1 // pred_check
      _
    $region27: #{tpu_custom_call.1} parent=1 // pred_check_branch
      %47 = sbr.rel (0) target = $region29
    $region28: #{tpu_custom_call.1} parent=1 // pred_region
      _
    $region29: #{tpu_custom_call.1} parent=1 // pred_fallthru
      _
    // Predicated region
    $region30: #{tpu_custom_call.1} parent=1 // pred_check
      _
    $region31: #{tpu_custom_call.1} parent=1 // pred_check_branch
      %49 = sbr.rel (0) target = $region33
    $region32: #{tpu_custom_call.1} parent=1 // pred_region
      _
    $region33: #{tpu_custom_call.1} parent=1 // pred_fallthru
      _
    // Predicated region
    $region34: #{tpu_custom_call.1} parent=1 // pred_check
      _
    $region35: #{tpu_custom_call.1} parent=1 // pred_check_branch
      %51 = sbr.rel (0) target = $region37
    $region36: #{tpu_custom_call.1} parent=1 // pred_region
      _
    $region37: #{tpu_custom_call.1} parent=1 // pred_fallthru
      _
    // Predicated region
    $region38: #{tpu_custom_call.1} parent=1 // pred_check
      _
    $region39: #{tpu_custom_call.1} parent=1 // pred_check_branch
      %53 = sbr.rel (0) target = $region41
    $region40: #{tpu_custom_call.1} parent=1 // pred_region
      _
    $region41: #{tpu_custom_call.1} parent=1 // pred_fallthru
      _
    // Predicated region
    $region42: #{tpu_custom_call.1} parent=1 // pred_check
      _
    $region43: #{tpu_custom_call.1} parent=1 // pred_check_branch
      %55 = sbr.rel (0) target = $region45
    $region44: #{tpu_custom_call.1} parent=1 // pred_region
      %56 = dma.done [#allocation3], 64
    $region45: #{tpu_custom_call.1} parent=1 // pred_fallthru
      _
    // Predicated region
    $region46: #{tpu_custom_call.1} parent=1 // pred_check
      _
    $region47: #{tpu_custom_call.1} parent=1 // pred_check_branch
      %58 = sbr.rel (0) target = $region49
    $region48: #{tpu_custom_call.1} parent=1 // pred_region
      %59 = dma.done [#allocation6], 64
    $region49: #{tpu_custom_call.1} parent=1 // pred_fallthru
      _
    %v60 = vld [vmem:[%s0] sm:$0xff]
    %v61 = vld [vmem:[%s0 + $0x8] sm:$0xff]
    %v62 = vld [vmem:[#allocation2] sm:$0xf]
    %v63 = vld [vmem:[%s3] sm:$0x1]
    %v65 = vlaneseq
    %v66 = vshrl.u32 %v65, 7
    %v67 = vsub.s32 0, %v66
    %v68 = vrot.slane %v63, %v67
    %vm70 = vcmask 31744
    %v72 = vsel %vm70, %v60, 0
    %v75 = vsel %vm70, %v61, 0
    %vm77 = vcmask 1043456
    %v79 = vsel %vm77, %v62, 0
    %81 = vmatprep.subr.mxu0 0.0
    %82 = vmatpush1.msra.mxu0 %v79
    %83 = vmatprep.subr.mxu0 0.0
    %84 = vmatpush1.msra.mxu0 0.0
    %85 = vmatprep.subr.mxu0 0.0
    %86 = vmatpush1.msra.mxu0 0.0
    %87 = vmatprep.subr.mxu0 0.0
    %88 = vmatpush1.msra.mxu0 0.0
    %89 = vmatprep.subr.mxu0 0.0
    %90 = vmatpush1.msra.mxu0 0.0
    %91 = vmatprep.subr.mxu0 0.0
    %92 = vmatpush1.msra.mxu0 0.0
    %93 = vmatprep.subr.mxu0 0.0
    %94 = vmatpush1.msra.mxu0 0.0
    %95 = vmatprep.subr.mxu0 0.0
    %96 = vmatpush1.msra.mxu0 0.0
    %97 = vmatprep.subr.mxu0 0.0
    %98 = vmatpush1.msra.mxu0 0.0
    %99 = vmatprep.subr.mxu0 0.0
    %100 = vmatpush1.msra.mxu0 0.0
    %101 = vmatprep.subr.mxu0 0.0
    %102 = vmatpush1.msra.mxu0 0.0
    %103 = vmatprep.subr.mxu0 0.0
    %104 = vmatpush1.msra.mxu0 0.0
    %105 = vmatprep.subr.mxu0 0.0
    %106 = vmatpush1.msra.mxu0 0.0
    %107 = vmatprep.subr.mxu0 0.0
    %108 = vmatpush1.msra.mxu0 0.0
    %109 = vmatprep.subr.mxu0 0.0
    %110 = vmatpush1.msra.mxu0 0.0
    %111 = vmatprep.subr.mxu0 0.0
    %112 = vmatpush1.msra.mxu0 0.0
    %113 = vmatprep.subr.mxu0 0.0
    %114 = vmatpush1.msra.mxu0 0.0
    %115 = vmatprep.subr.mxu0 0.0
    %116 = vmatpush1.msra.mxu0 0.0
    %117 = vmatprep.subr.mxu0 0.0
    %118 = vmatpush1.msra.mxu0 0.0
    %119 = vmatprep.subr.mxu0 0.0
    %120 = vmatpush1.msra.mxu0 0.0
    %121 = vmatprep.subr.mxu0 0.0
    %122 = vmatpush1.msra.mxu0 0.0
    %123 = vmatprep.subr.mxu0 0.0
    %124 = vmatpush1.msra.mxu0 0.0
    %125 = vmatprep.subr.mxu0 0.0
    %126 = vmatpush1.msra.mxu0 0.0
    %127 = vmatprep.subr.mxu0 0.0
    %128 = vmatpush1.msra.mxu0 0.0
    %129 = vmatprep.subr.mxu0 0.0
    %130 = vmatpush1.msra.mxu0 0.0
    %131 = vmatprep.subr.mxu0 0.0
    %132 = vmatpush1.msra.mxu0 0.0
    %133 = vmatprep.subr.mxu0 0.0
    %134 = vmatpush1.msra.mxu0 0.0
    %135 = vmatprep.subr.mxu0 0.0
    %136 = vmatpush1.msra.mxu0 0.0
    %137 = vmatprep.subr.mxu0 0.0
    %138 = vmatpush1.msra.mxu0 0.0
    %139 = vmatprep.subr.mxu0 0.0
    %140 = vmatpush1.msra.mxu0 0.0
    %141 = vmatprep.subr.mxu0 0.0
    %142 = vmatpush1.msra.mxu0 0.0
    %143 = vmatprep.subr.mxu0 0.0
    %144 = vmatpush1.msra.mxu0 0.0
    %145 = vmatprep.mubr.f32.mxu0 0.0
    %146 = vmatmul.mubr.f32.gmra.mrb[0].mxu0 %v72
    %v147 = vpop.f32.mrb[0].mxu0
    %v148 = vadd.f32 %v68, %v147
    %v149 = vpop.f32.mrb[0].mxu0
    %150 = vmatprep.mubr.f32.mxu0 0.0
    %151 = vmatmul.mubr.f32.gmra.mrb[0].mxu0 %v75
    %v152 = vpop.f32.mrb[0].mxu0
    %v153 = vadd.f32 %v68, %v152
    %v154 = vpop.f32.mrb[0].mxu0
    %155 = vdwg.mxu0
    %v156 = vld [vmem:[#allocation5] sm:$0xf]
    %v157 = vld [vmem:[%s4] sm:$0x1]
    %v159 = vlaneseq
    %v160 = vshrl.u32 %v159, 7
    %v161 = vsub.s32 0, %v160
    %v162 = vrot.slane %v157, %v161
    %v165 = vsel %vm77, %v156, 0
    %167 = vmatprep.subr.mxu0 0.0
    %168 = vmatpush1.msra.mxu0 %v165
    %169 = vmatprep.subr.mxu0 0.0
    %170 = vmatpush1.msra.mxu0 0.0
    %171 = vmatprep.subr.mxu0 0.0
    %172 = vmatpush1.msra.mxu0 0.0
    %173 = vmatprep.subr.mxu0 0.0
    %174 = vmatpush1.msra.mxu0 0.0
    %175 = vmatprep.subr.mxu0 0.0
    %176 = vmatpush1.msra.mxu0 0.0
    %177 = vmatprep.subr.mxu0 0.0
    %178 = vmatpush1.msra.mxu0 0.0
    %179 = vmatprep.subr.mxu0 0.0
    %180 = vmatpush1.msra.mxu0 0.0
    %181 = vmatprep.subr.mxu0 0.0
    %182 = vmatpush1.msra.mxu0 0.0
    %183 = vmatprep.subr.mxu0 0.0
    %184 = vmatpush1.msra.mxu0 0.0
    %185 = vmatprep.subr.mxu0 0.0
    %186 = vmatpush1.msra.mxu0 0.0
    %187 = vmatprep.subr.mxu0 0.0
    %188 = vmatpush1.msra.mxu0 0.0
    %189 = vmatprep.subr.mxu0 0.0
    %190 = vmatpush1.msra.mxu0 0.0
    %191 = vmatprep.subr.mxu0 0.0
    %192 = vmatpush1.msra.mxu0 0.0
    %193 = vmatprep.subr.mxu0 0.0
    %194 = vmatpush1.msra.mxu0 0.0
    %195 = vmatprep.subr.mxu0 0.0
    %196 = vmatpush1.msra.mxu0 0.0
    %197 = vmatprep.subr.mxu0 0.0
    %198 = vmatpush1.msra.mxu0 0.0
    %199 = vmatprep.subr.mxu0 0.0
    %200 = vmatpush1.msra.mxu0 0.0
    %201 = vmatprep.subr.mxu0 0.0
    %202 = vmatpush1.msra.mxu0 0.0
    %203 = vmatprep.subr.mxu0 0.0
    %204 = vmatpush1.msra.mxu0 0.0
    %205 = vmatprep.subr.mxu0 0.0
    %206 = vmatpush1.msra.mxu0 0.0
    %207 = vmatprep.subr.mxu0 0.0
    %208 = vmatpush1.msra.mxu0 0.0
    %209 = vmatprep.subr.mxu0 0.0
    %210 = vmatpush1.msra.mxu0 0.0
    %211 = vmatprep.subr.mxu0 0.0
    %212 = vmatpush1.msra.mxu0 0.0
    %213 = vmatprep.subr.mxu0 0.0
    %214 = vmatpush1.msra.mxu0 0.0
    %215 = vmatprep.subr.mxu0 0.0
    %216 = vmatpush1.msra.mxu0 0.0
    %217 = vmatprep.subr.mxu0 0.0
    %218 = vmatpush1.msra.mxu0 0.0
    %219 = vmatprep.subr.mxu0 0.0
    %220 = vmatpush1.msra.mxu0 0.0
    %221 = vmatprep.subr.mxu0 0.0
    %222 = vmatpush1.msra.mxu0 0.0
    %223 = vmatprep.subr.mxu0 0.0
    %224 = vmatpush1.msra.mxu0 0.0
    %225 = vmatprep.subr.mxu0 0.0
    %226 = vmatpush1.msra.mxu0 0.0
    %227 = vmatprep.subr.mxu0 0.0
    %228 = vmatpush1.msra.mxu0 0.0
    %229 = vmatprep.subr.mxu0 0.0
    %230 = vmatpush1.msra.mxu0 0.0
    %231 = vmatprep.mubr.f32.mxu0 0.0
    %232 = vmatmul.mubr.f32.gmra.mrb[0].mxu0 %v72
    %v233 = vpop.f32.mrb[0].mxu0
    %v234 = vadd.f32 %v162, %v233
    %v235 = vpop.f32.mrb[0].mxu0
    %236 = vmatprep.mubr.f32.mxu0 0.0
    %237 = vmatmul.mubr.f32.gmra.mrb[0].mxu0 %v75
    %v238 = vpop.f32.mrb[0].mxu0
    %v239 = vadd.f32 %v162, %v238
    %v240 = vpop.f32.mrb[0].mxu0
    %241 = vdwg.mxu0
    %v242 = vld [vmem:[%s5] sm:$0xff]
    %v243 = vld [vmem:[%s5 + $0x8] sm:$0xff]
    %v244 = vld [vmem:[%s5 + $0x10] sm:$0xff]
    %v245 = vld [vmem:[%s5 + $0x18] sm:$0xff]
    %v246 = vld [vmem:[%s6] sm:$0xff]
    %v247 = vld [vmem:[%s6 + $0x8] sm:$0xff]
    %v248 = vld [vmem:[%s6 + $0x10] sm:$0xff]
    %v249 = vld [vmem:[%s6 + $0x18] sm:$0xff]
    %v250 = vld [vmem:[%s7] sm:$0x1]
    %v252 = vlaneseq
    %v253 = vshrl.u32 %v252, 7
    %v254 = vsub.s32 0, %v253
    %v255 = vrot.slane %v250, %v254
    %v257 = vmul.f32 %v148, 0.5
    %v258 = vtanh.pop %v257
    %v259 = vadd.f32 %v258, 1.0
    %v260 = vmul.f32 %v259, 0.5
    %v261 = vmul.f32 %v260, %v255
    %v262 = vadd.f32 %v234, %v261
    %v263 = vtanh.pop %v262
    %v264 = vsub.f32 1.0, %v260
    %266 = vrot.lane.b32.xlu0 %v263, 32
    %v267 = vpop.permute.xlu0 %266
    %v269 = vmul.f32 %v264, %v267
    %271 = vrot.lane.b32.xlu0 %v269, 96
    %v272 = vpop.permute.xlu0 %271
    %vm273 = vcmask 261120
    %v274 = vsel %vm273, %v272, 0
    %276 = vmatprep.subr.mxu0 0.0
    %277 = vmatpush1.msra.mxu0 %v242
    %278 = vmatprep.subr.mxu0 0.0
    %279 = vmatpush1.msra.mxu0 %v243
    %280 = vmatprep.subr.mxu0 0.0
    %281 = vmatpush1.msra.mxu0 %v244
    %282 = vmatprep.subr.mxu0 0.0
    %283 = vmatpush1.msra.mxu0 %v245
    %284 = vmatprep.subr.mxu0 0.0
    %285 = vmatpush1.msra.mxu0 0.0
    %286 = vmatprep.subr.mxu0 0.0
    %287 = vmatpush1.msra.mxu0 0.0
    %288 = vmatprep.subr.mxu0 0.0
    %289 = vmatpush1.msra.mxu0 0.0
    %290 = vmatprep.subr.mxu0 0.0
    %291 = vmatpush1.msra.mxu0 0.0
    %292 = vmatprep.subr.mxu0 0.0
    %293 = vmatpush1.msra.mxu0 0.0
    %294 = vmatprep.subr.mxu0 0.0
    %295 = vmatpush1.msra.mxu0 0.0
    %296 = vmatprep.subr.mxu0 0.0
    %297 = vmatpush1.msra.mxu0 0.0
    %298 = vmatprep.subr.mxu0 0.0
    %299 = vmatpush1.msra.mxu0 0.0
    %300 = vmatprep.subr.mxu0 0.0
    %301 = vmatpush1.msra.mxu0 0.0
    %302 = vmatprep.subr.mxu0 0.0
    %303 = vmatpush1.msra.mxu0 0.0
    %304 = vmatprep.subr.mxu0 0.0
    %305 = vmatpush1.msra.mxu0 0.0
    %306 = vmatprep.subr.mxu0 0.0
    %307 = vmatpush1.msra.mxu0 0.0
    %308 = vmatprep.subr.mxu0 0.0
    %309 = vmatpush1.msra.mxu0 0.0
    %310 = vmatprep.subr.mxu0 0.0
    %311 = vmatpush1.msra.mxu0 0.0
    %312 = vmatprep.subr.mxu0 0.0
    %313 = vmatpush1.msra.mxu0 0.0
    %314 = vmatprep.subr.mxu0 0.0
    %315 = vmatpush1.msra.mxu0 0.0
    %316 = vmatprep.subr.mxu0 0.0
    %317 = vmatpush1.msra.mxu0 0.0
    %318 = vmatprep.subr.mxu0 0.0
    %319 = vmatpush1.msra.mxu0 0.0
    %320 = vmatprep.subr.mxu0 0.0
    %321 = vmatpush1.msra.mxu0 0.0
    %322 = vmatprep.subr.mxu0 0.0
    %323 = vmatpush1.msra.mxu0 0.0
    %324 = vmatprep.subr.mxu0 0.0
    %325 = vmatpush1.msra.mxu0 0.0
    %326 = vmatprep.subr.mxu0 0.0
    %327 = vmatpush1.msra.mxu0 0.0
    %328 = vmatprep.subr.mxu0 0.0
    %329 = vmatpush1.msra.mxu0 0.0
    %330 = vmatprep.subr.mxu0 0.0
    %331 = vmatpush1.msra.mxu0 0.0
    %332 = vmatprep.subr.mxu0 0.0
    %333 = vmatpush1.msra.mxu0 0.0
    %334 = vmatprep.subr.mxu0 0.0
    %335 = vmatpush1.msra.mxu0 0.0
    %336 = vmatprep.subr.mxu0 0.0
    %337 = vmatpush1.msra.mxu0 0.0
    %338 = vmatprep.subr.mxu0 0.0
    %339 = vmatpush1.msra.mxu0 0.0
    %340 = vmatprep.mubr.f32.mxu0 0.0
    %341 = vmatmul.mubr.f32.gmra.mrb[0].mxu0 %v274
    %v342 = vpop.f32.mrb[0].mxu0
    %v343 = vadd.f32 0.0, %v342
    %v344 = vpop.f32.mrb[0].mxu0
    %345 = vdwg.mxu0
    %v347 = vrot.slane %v343, 6
    %v349 = vadd.f32 %v148, %v347
    %v350 = vmul.f32 %v349, 0.5
    %v351 = vtanh.pop %v350
    %v352 = vadd.f32 %v351, 1.0
    %v353 = vmul.f32 %v352, 0.5
    %354 = vmatprep.subr.mxu0 0.0
    %355 = vmatpush1.msra.mxu0 %v246
    %356 = vmatprep.subr.mxu0 0.0
    %357 = vmatpush1.msra.mxu0 %v247
    %358 = vmatprep.subr.mxu0 0.0
    %359 = vmatpush1.msra.mxu0 %v248
    %360 = vmatprep.subr.mxu0 0.0
    %361 = vmatpush1.msra.mxu0 %v249
    %362 = vmatprep.subr.mxu0 0.0
    %363 = vmatpush1.msra.mxu0 0.0
    %364 = vmatprep.subr.mxu0 0.0
    %365 = vmatpush1.msra.mxu0 0.0
    %366 = vmatprep.subr.mxu0 0.0
    %367 = vmatpush1.msra.mxu0 0.0
    %368 = vmatprep.subr.mxu0 0.0
    %369 = vmatpush1.msra.mxu0 0.0
    %370 = vmatprep.subr.mxu0 0.0
    %371 = vmatpush1.msra.mxu0 0.0
    %372 = vmatprep.subr.mxu0 0.0
    %373 = vmatpush1.msra.mxu0 0.0
    %374 = vmatprep.subr.mxu0 0.0
    %375 = vmatpush1.msra.mxu0 0.0
    %376 = vmatprep.subr.mxu0 0.0
    %377 = vmatpush1.msra.mxu0 0.0
    %378 = vmatprep.subr.mxu0 0.0
    %379 = vmatpush1.msra.mxu0 0.0
    %380 = vmatprep.subr.mxu0 0.0
    %381 = vmatpush1.msra.mxu0 0.0
    %382 = vmatprep.subr.mxu0 0.0
    %383 = vmatpush1.msra.mxu0 0.0
    %384 = vmatprep.subr.mxu0 0.0
    %385 = vmatpush1.msra.mxu0 0.0
    %386 = vmatprep.subr.mxu0 0.0
    %387 = vmatpush1.msra.mxu0 0.0
    %388 = vmatprep.subr.mxu0 0.0
    %389 = vmatpush1.msra.mxu0 0.0
    %390 = vmatprep.subr.mxu0 0.0
    %391 = vmatpush1.msra.mxu0 0.0
    %392 = vmatprep.subr.mxu0 0.0
    %393 = vmatpush1.msra.mxu0 0.0
    %394 = vmatprep.subr.mxu0 0.0
    %395 = vmatpush1.msra.mxu0 0.0
    %396 = vmatprep.subr.mxu0 0.0
    %397 = vmatpush1.msra.mxu0 0.0
    %398 = vmatprep.subr.mxu0 0.0
    %399 = vmatpush1.msra.mxu0 0.0
    %400 = vmatprep.subr.mxu0 0.0
    %401 = vmatpush1.msra.mxu0 0.0
    %402 = vmatprep.subr.mxu0 0.0
    %403 = vmatpush1.msra.mxu0 0.0
    %404 = vmatprep.subr.mxu0 0.0
    %405 = vmatpush1.msra.mxu0 0.0
    %406 = vmatprep.subr.mxu0 0.0
    %407 = vmatpush1.msra.mxu0 0.0
    %408 = vmatprep.subr.mxu0 0.0
    %409 = vmatpush1.msra.mxu0 0.0
    %410 = vmatprep.subr.mxu0 0.0
    %411 = vmatpush1.msra.mxu0 0.0
    %412 = vmatprep.subr.mxu0 0.0
    %413 = vmatpush1.msra.mxu0 0.0
    %414 = vmatprep.subr.mxu0 0.0
    %415 = vmatpush1.msra.mxu0 0.0
    %416 = vmatprep.subr.mxu0 0.0
    %417 = vmatpush1.msra.mxu0 0.0
    %418 = vmatprep.mubr.f32.mxu0 0.0
    %419 = vmatmul.mubr.f32.gmra.mrb[0].mxu0 %v274
    %v420 = vpop.f32.mrb[0].mxu0
    %v421 = vadd.f32 %v255, %v420
    %v422 = vpop.f32.mrb[0].mxu0
    %423 = vdwg.mxu0
    %v425 = vrot.slane %v421, 6
    %v427 = vmul.f32 %v353, %v425
    %v428 = vadd.f32 %v234, %v427
    %v429 = vtanh.pop %v428
    %v430 = vsub.f32 1.0, %v353
    %432 = vrot.lane.b32.xlu0 %v429, 32
    %v433 = vpop.permute.xlu0 %432
    %v435 = vmul.f32 %v430, %v433
    %v436 = vrot.slane %v269, 6
    %v438 = vmul.f32 %v353, %v436
    %v439 = vadd.f32 %v435, %v438
    %v441 = vrot.slane %v439, 2
    %442 = vrot.lane.b32.xlu0 %v441, 96
    %v443 = vpop.permute.xlu0 %442
    %v444 = vsel %vm273, %v443, 0
    %446 = vmatprep.subr.mxu0 0.0
    %447 = vmatpush1.msra.mxu0 %v242
    %448 = vmatprep.subr.mxu0 0.0
    %449 = vmatpush1.msra.mxu0 %v243
    %450 = vmatprep.subr.mxu0 0.0
    %451 = vmatpush1.msra.mxu0 %v244
    %452 = vmatprep.subr.mxu0 0.0
    %453 = vmatpush1.msra.mxu0 %v245
    %454 = vmatprep.subr.mxu0 0.0
    %455 = vmatpush1.msra.mxu0 0.0
    %456 = vmatprep.subr.mxu0 0.0
    %457 = vmatpush1.msra.mxu0 0.0
    %458 = vmatprep.subr.mxu0 0.0
    %459 = vmatpush1.msra.mxu0 0.0
    %460 = vmatprep.subr.mxu0 0.0
    %461 = vmatpush1.msra.mxu0 0.0
    %462 = vmatprep.subr.mxu0 0.0
    %463 = vmatpush1.msra.mxu0 0.0
    %464 = vmatprep.subr.mxu0 0.0
    %465 = vmatpush1.msra.mxu0 0.0
    %466 = vmatprep.subr.mxu0 0.0
    %467 = vmatpush1.msra.mxu0 0.0
    %468 = vmatprep.subr.mxu0 0.0
    %469 = vmatpush1.msra.mxu0 0.0
    %470 = vmatprep.subr.mxu0 0.0
    %471 = vmatpush1.msra.mxu0 0.0
    %472 = vmatprep.subr.mxu0 0.0
    %473 = vmatpush1.msra.mxu0 0.0
    %474 = vmatprep.subr.mxu0 0.0
    %475 = vmatpush1.msra.mxu0 0.0
    %476 = vmatprep.subr.mxu0 0.0
    %477 = vmatpush1.msra.mxu0 0.0
    %478 = vmatprep.subr.mxu0 0.0
    %479 = vmatpush1.msra.mxu0 0.0
    %480 = vmatprep.subr.mxu0 0.0
    %481 = vmatpush1.msra.mxu0 0.0
    %482 = vmatprep.subr.mxu0 0.0
    %483 = vmatpush1.msra.mxu0 0.0
    %484 = vmatprep.subr.mxu0 0.0
    %485 = vmatpush1.msra.mxu0 0.0
    %486 = vmatprep.subr.mxu0 0.0
    %487 = vmatpush1.msra.mxu0 0.0
    %488 = vmatprep.subr.mxu0 0.0
    %489 = vmatpush1.msra.mxu0 0.0
    %490 = vmatprep.subr.mxu0 0.0
    %491 = vmatpush1.msra.mxu0 0.0
    %492 = vmatprep.subr.mxu0 0.0
    %493 = vmatpush1.msra.mxu0 0.0
    %494 = vmatprep.subr.mxu0 0.0
    %495 = vmatpush1.msra.mxu0 0.0
    %496 = vmatprep.subr.mxu0 0.0
    %497 = vmatpush1.msra.mxu0 0.0
    %498 = vmatprep.subr.mxu0 0.0
    %499 = vmatpush1.msra.mxu0 0.0
    %500 = vmatprep.subr.mxu0 0.0
    %501 = vmatpush1.msra.mxu0 0.0
    %502 = vmatprep.subr.mxu0 0.0
    %503 = vmatpush1.msra.mxu0 0.0
    %504 = vmatprep.subr.mxu0 0.0
    %505 = vmatpush1.msra.mxu0 0.0
    %506 = vmatprep.subr.mxu0 0.0
    %507 = vmatpush1.msra.mxu0 0.0
    %508 = vmatprep.subr.mxu0 0.0
    %509 = vmatpush1.msra.mxu0 0.0
    %510 = vmatprep.mubr.f32.mxu0 0.0
    %511 = vmatmul.mubr.f32.gmra.mrb[0].mxu0 %v444
    %v512 = vpop.f32.mrb[0].mxu0
    %v513 = vadd.f32 0.0, %v512
    %v514 = vpop.f32.mrb[0].mxu0
    %515 = vdwg.mxu0
    %v517 = vrot.slane %v513, 4
    %v519 = vadd.f32 %v148, %v517
    %v520 = vmul.f32 %v519, 0.5
    %v521 = vtanh.pop %v520
    %v522 = vadd.f32 %v521, 1.0
    %v523 = vmul.f32 %v522, 0.5
    %524 = vmatprep.subr.mxu0 0.0
    %525 = vmatpush1.msra.mxu0 %v246
    %526 = vmatprep.subr.mxu0 0.0
    %527 = vmatpush1.msra.mxu0 %v247
    %528 = vmatprep.subr.mxu0 0.0
    %529 = vmatpush1.msra.mxu0 %v248
    %530 = vmatprep.subr.mxu0 0.0
    %531 = vmatpush1.msra.mxu0 %v249
    %532 = vmatprep.subr.mxu0 0.0
    %533 = vmatpush1.msra.mxu0 0.0
    %534 = vmatprep.subr.mxu0 0.0
    %535 = vmatpush1.msra.mxu0 0.0
    %536 = vmatprep.subr.mxu0 0.0
    %537 = vmatpush1.msra.mxu0 0.0
    %538 = vmatprep.subr.mxu0 0.0
    %539 = vmatpush1.msra.mxu0 0.0
    %540 = vmatprep.subr.mxu0 0.0
    %541 = vmatpush1.msra.mxu0 0.0
    %542 = vmatprep.subr.mxu0 0.0
    %543 = vmatpush1.msra.mxu0 0.0
    %544 = vmatprep.subr.mxu0 0.0
    %545 = vmatpush1.msra.mxu0 0.0
    %546 = vmatprep.subr.mxu0 0.0
    %547 = vmatpush1.msra.mxu0 0.0
    %548 = vmatprep.subr.mxu0 0.0
    %549 = vmatpush1.msra.mxu0 0.0
    %550 = vmatprep.subr.mxu0 0.0
    %551 = vmatpush1.msra.mxu0 0.0
    %552 = vmatprep.subr.mxu0 0.0
    %553 = vmatpush1.msra.mxu0 0.0
    %554 = vmatprep.subr.mxu0 0.0
    %555 = vmatpush1.msra.mxu0 0.0
    %556 = vmatprep.subr.mxu0 0.0
    %557 = vmatpush1.msra.mxu0 0.0
    %558 = vmatprep.subr.mxu0 0.0
    %559 = vmatpush1.msra.mxu0 0.0
    %560 = vmatprep.subr.mxu0 0.0
    %561 = vmatpush1.msra.mxu0 0.0
    %562 = vmatprep.subr.mxu0 0.0
    %563 = vmatpush1.msra.mxu0 0.0
    %564 = vmatprep.subr.mxu0 0.0
    %565 = vmatpush1.msra.mxu0 0.0
    %566 = vmatprep.subr.mxu0 0.0
    %567 = vmatpush1.msra.mxu0 0.0
    %568 = vmatprep.subr.mxu0 0.0
    %569 = vmatpush1.msra.mxu0 0.0
    %570 = vmatprep.subr.mxu0 0.0
    %571 = vmatpush1.msra.mxu0 0.0
    %572 = vmatprep.subr.mxu0 0.0
    %573 = vmatpush1.msra.mxu0 0.0
    %574 = vmatprep.subr.mxu0 0.0
    %575 = vmatpush1.msra.mxu0 0.0
    %576 = vmatprep.subr.mxu0 0.0
    %577 = vmatpush1.msra.mxu0 0.0
    %578 = vmatprep.subr.mxu0 0.0
    %579 = vmatpush1.msra.mxu0 0.0
    %580 = vmatprep.subr.mxu0 0.0
    %581 = vmatpush1.msra.mxu0 0.0
    %582 = vmatprep.subr.mxu0 0.0
    %583 = vmatpush1.msra.mxu0 0.0
    %584 = vmatprep.subr.mxu0 0.0
    %585 = vmatpush1.msra.mxu0 0.0
    %586 = vmatprep.subr.mxu0 0.0
    %587 = vmatpush1.msra.mxu0 0.0
    %588 = vmatprep.mubr.f32.mxu0 0.0
    %589 = vmatmul.mubr.f32.gmra.mrb[0].mxu0 %v444
    %v590 = vpop.f32.mrb[0].mxu0
    %v591 = vadd.f32 %v255, %v590
    %v592 = vpop.f32.mrb[0].mxu0
    %593 = vdwg.mxu0
    %v595 = vrot.slane %v591, 4
    %v597 = vmul.f32 %v523, %v595
    %v598 = vadd.f32 %v234, %v597
    %v599 = vtanh.pop %v598
    %v600 = vsub.f32 1.0, %v523
    %602 = vrot.lane.b32.xlu0 %v599, 32
    %v603 = vpop.permute.xlu0 %602
    %v605 = vmul.f32 %v600, %v603
    %v606 = vrot.slane %v439, 6
    %v608 = vmul.f32 %v523, %v606
    %v609 = vadd.f32 %v605, %v608
    %v611 = vrot.slane %v609, 4
    %612 = vrot.lane.b32.xlu0 %v611, 96
    %v613 = vpop.permute.xlu0 %612
    %v614 = vsel %vm273, %v613, 0
    %616 = vmatprep.subr.mxu0 0.0
    %617 = vmatpush1.msra.mxu0 %v242
    %618 = vmatprep.subr.mxu0 0.0
    %619 = vmatpush1.msra.mxu0 %v243
    %620 = vmatprep.subr.mxu0 0.0
    %621 = vmatpush1.msra.mxu0 %v244
    %622 = vmatprep.subr.mxu0 0.0
    %623 = vmatpush1.msra.mxu0 %v245
    %624 = vmatprep.subr.mxu0 0.0
    %625 = vmatpush1.msra.mxu0 0.0
    %626 = vmatprep.subr.mxu0 0.0
    %627 = vmatpush1.msra.mxu0 0.0
    %628 = vmatprep.subr.mxu0 0.0
    %629 = vmatpush1.msra.mxu0 0.0
    %630 = vmatprep.subr.mxu0 0.0
    %631 = vmatpush1.msra.mxu0 0.0
    %632 = vmatprep.subr.mxu0 0.0
    %633 = vmatpush1.msra.mxu0 0.0
    %634 = vmatprep.subr.mxu0 0.0
    %635 = vmatpush1.msra.mxu0 0.0
    %636 = vmatprep.subr.mxu0 0.0
    %637 = vmatpush1.msra.mxu0 0.0
    %638 = vmatprep.subr.mxu0 0.0
    %639 = vmatpush1.msra.mxu0 0.0
    %640 = vmatprep.subr.mxu0 0.0
    %641 = vmatpush1.msra.mxu0 0.0
    %642 = vmatprep.subr.mxu0 0.0
    %643 = vmatpush1.msra.mxu0 0.0
    %644 = vmatprep.subr.mxu0 0.0
    %645 = vmatpush1.msra.mxu0 0.0
    %646 = vmatprep.subr.mxu0 0.0
    %647 = vmatpush1.msra.mxu0 0.0
    %648 = vmatprep.subr.mxu0 0.0
    %649 = vmatpush1.msra.mxu0 0.0
    %650 = vmatprep.subr.mxu0 0.0
    %651 = vmatpush1.msra.mxu0 0.0
    %652 = vmatprep.subr.mxu0 0.0
    %653 = vmatpush1.msra.mxu0 0.0
    %654 = vmatprep.subr.mxu0 0.0
    %655 = vmatpush1.msra.mxu0 0.0
    %656 = vmatprep.subr.mxu0 0.0
    %657 = vmatpush1.msra.mxu0 0.0
    %658 = vmatprep.subr.mxu0 0.0
    %659 = vmatpush1.msra.mxu0 0.0
    %660 = vmatprep.subr.mxu0 0.0
    %661 = vmatpush1.msra.mxu0 0.0
    %662 = vmatprep.subr.mxu0 0.0
    %663 = vmatpush1.msra.mxu0 0.0
    %664 = vmatprep.subr.mxu0 0.0
    %665 = vmatpush1.msra.mxu0 0.0
    %666 = vmatprep.subr.mxu0 0.0
    %667 = vmatpush1.msra.mxu0 0.0
    %668 = vmatprep.subr.mxu0 0.0
    %669 = vmatpush1.msra.mxu0 0.0
    %670 = vmatprep.subr.mxu0 0.0
    %671 = vmatpush1.msra.mxu0 0.0
    %672 = vmatprep.subr.mxu0 0.0
    %673 = vmatpush1.msra.mxu0 0.0
    %674 = vmatprep.subr.mxu0 0.0
    %675 = vmatpush1.msra.mxu0 0.0
    %676 = vmatprep.subr.mxu0 0.0
    %677 = vmatpush1.msra.mxu0 0.0
    %678 = vmatprep.subr.mxu0 0.0
    %679 = vmatpush1.msra.mxu0 0.0
    %680 = vmatprep.mubr.f32.mxu0 0.0
    %681 = vmatmul.mubr.f32.gmra.mrb[0].mxu0 %v614
    %v682 = vpop.f32.mrb[0].mxu0
    %v683 = vadd.f32 0.0, %v682
    %v684 = vpop.f32.mrb[0].mxu0
    %685 = vdwg.mxu0
    %v687 = vrot.slane %v683, 2
    %v689 = vadd.f32 %v148, %v687
    %v690 = vmul.f32 %v689, 0.5
    %v691 = vtanh.pop %v690
    %v692 = vadd.f32 %v691, 1.0
    %v693 = vmul.f32 %v692, 0.5
    %694 = vmatprep.subr.mxu0 0.0
    %695 = vmatpush1.msra.mxu0 %v246
    %696 = vmatprep.subr.mxu0 0.0
    %697 = vmatpush1.msra.mxu0 %v247
    %698 = vmatprep.subr.mxu0 0.0
    %699 = vmatpush1.msra.mxu0 %v248
    %700 = vmatprep.subr.mxu0 0.0
    %701 = vmatpush1.msra.mxu0 %v249
    %702 = vmatprep.subr.mxu0 0.0
    %703 = vmatpush1.msra.mxu0 0.0
    %704 = vmatprep.subr.mxu0 0.0
    %705 = vmatpush1.msra.mxu0 0.0
    %706 = vmatprep.subr.mxu0 0.0
    %707 = vmatpush1.msra.mxu0 0.0
    %708 = vmatprep.subr.mxu0 0.0
    %709 = vmatpush1.msra.mxu0 0.0
    %710 = vmatprep.subr.mxu0 0.0
    %711 = vmatpush1.msra.mxu0 0.0
    %712 = vmatprep.subr.mxu0 0.0
    %713 = vmatpush1.msra.mxu0 0.0
    %714 = vmatprep.subr.mxu0 0.0
    %715 = vmatpush1.msra.mxu0 0.0
    %716 = vmatprep.subr.mxu0 0.0
    %717 = vmatpush1.msra.mxu0 0.0
    %718 = vmatprep.subr.mxu0 0.0
    %719 = vmatpush1.msra.mxu0 0.0
    %720 = vmatprep.subr.mxu0 0.0
    %721 = vmatpush1.msra.mxu0 0.0
    %722 = vmatprep.subr.mxu0 0.0
    %723 = vmatpush1.msra.mxu0 0.0
    %724 = vmatprep.subr.mxu0 0.0
    %725 = vmatpush1.msra.mxu0 0.0
    %726 = vmatprep.subr.mxu0 0.0
    %727 = vmatpush1.msra.mxu0 0.0
    %728 = vmatprep.subr.mxu0 0.0
    %729 = vmatpush1.msra.mxu0 0.0
    %730 = vmatprep.subr.mxu0 0.0
    %731 = vmatpush1.msra.mxu0 0.0
    %732 = vmatprep.subr.mxu0 0.0
    %733 = vmatpush1.msra.mxu0 0.0
    %734 = vmatprep.subr.mxu0 0.0
    %735 = vmatpush1.msra.mxu0 0.0
    %736 = vmatprep.subr.mxu0 0.0
    %737 = vmatpush1.msra.mxu0 0.0
    %738 = vmatprep.subr.mxu0 0.0
    %739 = vmatpush1.msra.mxu0 0.0
    %740 = vmatprep.subr.mxu0 0.0
    %741 = vmatpush1.msra.mxu0 0.0
    %742 = vmatprep.subr.mxu0 0.0
    %743 = vmatpush1.msra.mxu0 0.0
    %744 = vmatprep.subr.mxu0 0.0
    %745 = vmatpush1.msra.mxu0 0.0
    %746 = vmatprep.subr.mxu0 0.0
    %747 = vmatpush1.msra.mxu0 0.0
    %748 = vmatprep.subr.mxu0 0.0
    %749 = vmatpush1.msra.mxu0 0.0
    %750 = vmatprep.subr.mxu0 0.0
    %751 = vmatpush1.msra.mxu0 0.0
    %752 = vmatprep.subr.mxu0 0.0
    %753 = vmatpush1.msra.mxu0 0.0
    %754 = vmatprep.subr.mxu0 0.0
    %755 = vmatpush1.msra.mxu0 0.0
    %756 = vmatprep.subr.mxu0 0.0
    %757 = vmatpush1.msra.mxu0 0.0
    %758 = vmatprep.mubr.f32.mxu0 0.0
    %759 = vmatmul.mubr.f32.gmra.mrb[0].mxu0 %v614
    %v760 = vpop.f32.mrb[0].mxu0
    %v761 = vadd.f32 %v255, %v760
    %v762 = vpop.f32.mrb[0].mxu0
    %763 = vdwg.mxu0
    %v765 = vrot.slane %v761, 2
    %v767 = vmul.f32 %v693, %v765
    %v768 = vadd.f32 %v234, %v767
    %v769 = vtanh.pop %v768
    %v770 = vsub.f32 1.0, %v693
    %772 = vrot.lane.b32.xlu0 %v769, 32
    %v773 = vpop.permute.xlu0 %772
    %v775 = vmul.f32 %v770, %v773
    %v776 = vrot.slane %v609, 6
    %v778 = vmul.f32 %v693, %v776
    %v779 = vadd.f32 %v775, %v778
    %v781 = vrot.slane %v779, 6
    %782 = vrot.lane.b32.xlu0 %v781, 96
    %v783 = vpop.permute.xlu0 %782
    %v784 = vsel %vm273, %v783, 0
    %786 = vmatprep.subr.mxu0 0.0
    %787 = vmatpush1.msra.mxu0 %v242
    %788 = vmatprep.subr.mxu0 0.0
    %789 = vmatpush1.msra.mxu0 %v243
    %790 = vmatprep.subr.mxu0 0.0
    %791 = vmatpush1.msra.mxu0 %v244
    %792 = vmatprep.subr.mxu0 0.0
    %793 = vmatpush1.msra.mxu0 %v245
    %794 = vmatprep.subr.mxu0 0.0
    %795 = vmatpush1.msra.mxu0 0.0
    %796 = vmatprep.subr.mxu0 0.0
    %797 = vmatpush1.msra.mxu0 0.0
    %798 = vmatprep.subr.mxu0 0.0
    %799 = vmatpush1.msra.mxu0 0.0
    %800 = vmatprep.subr.mxu0 0.0
    %801 = vmatpush1.msra.mxu0 0.0
    %802 = vmatprep.subr.mxu0 0.0
    %803 = vmatpush1.msra.mxu0 0.0
    %804 = vmatprep.subr.mxu0 0.0
    %805 = vmatpush1.msra.mxu0 0.0
    %806 = vmatprep.subr.mxu0 0.0
    %807 = vmatpush1.msra.mxu0 0.0
    %808 = vmatprep.subr.mxu0 0.0
    %809 = vmatpush1.msra.mxu0 0.0
    %810 = vmatprep.subr.mxu0 0.0
    %811 = vmatpush1.msra.mxu0 0.0
    %812 = vmatprep.subr.mxu0 0.0
    %813 = vmatpush1.msra.mxu0 0.0
    %814 = vmatprep.subr.mxu0 0.0
    %815 = vmatpush1.msra.mxu0 0.0
    %816 = vmatprep.subr.mxu0 0.0
    %817 = vmatpush1.msra.mxu0 0.0
    %818 = vmatprep.subr.mxu0 0.0
    %819 = vmatpush1.msra.mxu0 0.0
    %820 = vmatprep.subr.mxu0 0.0
    %821 = vmatpush1.msra.mxu0 0.0
    %822 = vmatprep.subr.mxu0 0.0
    %823 = vmatpush1.msra.mxu0 0.0
    %824 = vmatprep.subr.mxu0 0.0
    %825 = vmatpush1.msra.mxu0 0.0
    %826 = vmatprep.subr.mxu0 0.0
    %827 = vmatpush1.msra.mxu0 0.0
    %828 = vmatprep.subr.mxu0 0.0
    %829 = vmatpush1.msra.mxu0 0.0
    %830 = vmatprep.subr.mxu0 0.0
    %831 = vmatpush1.msra.mxu0 0.0
    %832 = vmatprep.subr.mxu0 0.0
    %833 = vmatpush1.msra.mxu0 0.0
    %834 = vmatprep.subr.mxu0 0.0
    %835 = vmatpush1.msra.mxu0 0.0
    %836 = vmatprep.subr.mxu0 0.0
    %837 = vmatpush1.msra.mxu0 0.0
    %838 = vmatprep.subr.mxu0 0.0
    %839 = vmatpush1.msra.mxu0 0.0
    %840 = vmatprep.subr.mxu0 0.0
    %841 = vmatpush1.msra.mxu0 0.0
    %842 = vmatprep.subr.mxu0 0.0
    %843 = vmatpush1.msra.mxu0 0.0
    %844 = vmatprep.subr.mxu0 0.0
    %845 = vmatpush1.msra.mxu0 0.0
    %846 = vmatprep.subr.mxu0 0.0
    %847 = vmatpush1.msra.mxu0 0.0
    %848 = vmatprep.subr.mxu0 0.0
    %849 = vmatpush1.msra.mxu0 0.0
    %850 = vmatprep.mubr.f32.mxu0 0.0
    %851 = vmatmul.mubr.f32.gmra.mrb[0].mxu0 %v784
    %v852 = vpop.f32.mrb[0].mxu0
    %v853 = vadd.f32 0.0, %v852
    %v854 = vpop.f32.mrb[0].mxu0
    %855 = vdwg.mxu0
    %v856 = vadd.f32 %v153, %v853
    %v857 = vmul.f32 %v856, 0.5
    %v858 = vtanh.pop %v857
    %v859 = vadd.f32 %v858, 1.0
    %v860 = vmul.f32 %v859, 0.5
    %861 = vmatprep.subr.mxu0 0.0
    %862 = vmatpush1.msra.mxu0 %v246
    %863 = vmatprep.subr.mxu0 0.0
    %864 = vmatpush1.msra.mxu0 %v247
    %865 = vmatprep.subr.mxu0 0.0
    %866 = vmatpush1.msra.mxu0 %v248
    %867 = vmatprep.subr.mxu0 0.0
    %868 = vmatpush1.msra.mxu0 %v249
    %869 = vmatprep.subr.mxu0 0.0
    %870 = vmatpush1.msra.mxu0 0.0
    %871 = vmatprep.subr.mxu0 0.0
    %872 = vmatpush1.msra.mxu0 0.0
    %873 = vmatprep.subr.mxu0 0.0
    %874 = vmatpush1.msra.mxu0 0.0
    %875 = vmatprep.subr.mxu0 0.0
    %876 = vmatpush1.msra.mxu0 0.0
    %877 = vmatprep.subr.mxu0 0.0
    %878 = vmatpush1.msra.mxu0 0.0
    %879 = vmatprep.subr.mxu0 0.0
    %880 = vmatpush1.msra.mxu0 0.0
    %881 = vmatprep.subr.mxu0 0.0
    %882 = vmatpush1.msra.mxu0 0.0
    %883 = vmatprep.subr.mxu0 0.0
    %884 = vmatpush1.msra.mxu0 0.0
    %885 = vmatprep.subr.mxu0 0.0
    %886 = vmatpush1.msra.mxu0 0.0
    %887 = vmatprep.subr.mxu0 0.0
    %888 = vmatpush1.msra.mxu0 0.0
    %889 = vmatprep.subr.mxu0 0.0
    %890 = vmatpush1.msra.mxu0 0.0
    %891 = vmatprep.subr.mxu0 0.0
    %892 = vmatpush1.msra.mxu0 0.0
    %893 = vmatprep.subr.mxu0 0.0
    %894 = vmatpush1.msra.mxu0 0.0
    %895 = vmatprep.subr.mxu0 0.0
    %896 = vmatpush1.msra.mxu0 0.0
    %897 = vmatprep.subr.mxu0 0.0
    %898 = vmatpush1.msra.mxu0 0.0
    %899 = vmatprep.subr.mxu0 0.0
    %900 = vmatpush1.msra.mxu0 0.0
    %901 = vmatprep.subr.mxu0 0.0
    %902 = vmatpush1.msra.mxu0 0.0
    %903 = vmatprep.subr.mxu0 0.0
    %904 = vmatpush1.msra.mxu0 0.0
    %905 = vmatprep.subr.mxu0 0.0
    %906 = vmatpush1.msra.mxu0 0.0
    %907 = vmatprep.subr.mxu0 0.0
    %908 = vmatpush1.msra.mxu0 0.0
    %909 = vmatprep.subr.mxu0 0.0
    %910 = vmatpush1.msra.mxu0 0.0
    %911 = vmatprep.subr.mxu0 0.0
    %912 = vmatpush1.msra.mxu0 0.0
    %913 = vmatprep.subr.mxu0 0.0
    %914 = vmatpush1.msra.mxu0 0.0
    %915 = vmatprep.subr.mxu0 0.0
    %916 = vmatpush1.msra.mxu0 0.0
    %917 = vmatprep.subr.mxu0 0.0
    %918 = vmatpush1.msra.mxu0 0.0
    %919 = vmatprep.subr.mxu0 0.0
    %920 = vmatpush1.msra.mxu0 0.0
    %921 = vmatprep.subr.mxu0 0.0
    %922 = vmatpush1.msra.mxu0 0.0
    %923 = vmatprep.subr.mxu0 0.0
    %924 = vmatpush1.msra.mxu0 0.0
    %925 = vmatprep.mubr.f32.mxu0 0.0
    %926 = vmatmul.mubr.f32.gmra.mrb[0].mxu0 %v784
    %v927 = vpop.f32.mrb[0].mxu0
    %v928 = vadd.f32 %v255, %v927
    %v929 = vpop.f32.mrb[0].mxu0
    %930 = vdwg.mxu0
    %v931 = vmul.f32 %v860, %v928
    %v932 = vadd.f32 %v239, %v931
    %v933 = vtanh.pop %v932
    %v934 = vsub.f32 1.0, %v860
    %936 = vrot.lane.b32.xlu0 %v933, 32
    %v937 = vpop.permute.xlu0 %936
    %v939 = vmul.f32 %v934, %v937
    %v941 = vmul.f32 %v860, %v781
    %v942 = vadd.f32 %v939, %v941
    %944 = vrot.lane.b32.xlu0 %v942, 96
    %v945 = vpop.permute.xlu0 %944
    %v946 = vsel %vm273, %v945, 0
    %948 = vmatprep.subr.mxu0 0.0
    %949 = vmatpush1.msra.mxu0 %v242
    %950 = vmatprep.subr.mxu0 0.0
    %951 = vmatpush1.msra.mxu0 %v243
    %952 = vmatprep.subr.mxu0 0.0
    %953 = vmatpush1.msra.mxu0 %v244
    %954 = vmatprep.subr.mxu0 0.0
    %955 = vmatpush1.msra.mxu0 %v245
    %956 = vmatprep.subr.mxu0 0.0
    %957 = vmatpush1.msra.mxu0 0.0
    %958 = vmatprep.subr.mxu0 0.0
    %959 = vmatpush1.msra.mxu0 0.0
    %960 = vmatprep.subr.mxu0 0.0
    %961 = vmatpush1.msra.mxu0 0.0
    %962 = vmatprep.subr.mxu0 0.0
    %963 = vmatpush1.msra.mxu0 0.0
    %964 = vmatprep.subr.mxu0 0.0
    %965 = vmatpush1.msra.mxu0 0.0
    %966 = vmatprep.subr.mxu0 0.0
    %967 = vmatpush1.msra.mxu0 0.0
    %968 = vmatprep.subr.mxu0 0.0
    %969 = vmatpush1.msra.mxu0 0.0
    %970 = vmatprep.subr.mxu0 0.0
    %971 = vmatpush1.msra.mxu0 0.0
    %972 = vmatprep.subr.mxu0 0.0
    %973 = vmatpush1.msra.mxu0 0.0
    %974 = vmatprep.subr.mxu0 0.0
    %975 = vmatpush1.msra.mxu0 0.0
    %976 = vmatprep.subr.mxu0 0.0
    %977 = vmatpush1.msra.mxu0 0.0
    %978 = vmatprep.subr.mxu0 0.0
    %979 = vmatpush1.msra.mxu0 0.0
    %980 = vmatprep.subr.mxu0 0.0
    %981 = vmatpush1.msra.mxu0 0.0
    %982 = vmatprep.subr.mxu0 0.0
    %983 = vmatpush1.msra.mxu0 0.0
    %984 = vmatprep.subr.mxu0 0.0
    %985 = vmatpush1.msra.mxu0 0.0
    %986 = vmatprep.subr.mxu0 0.0
    %987 = vmatpush1.msra.mxu0 0.0
    %988 = vmatprep.subr.mxu0 0.0
    %989 = vmatpush1.msra.mxu0 0.0
    %990 = vmatprep.subr.mxu0 0.0
    %991 = vmatpush1.msra.mxu0 0.0
    %992 = vmatprep.subr.mxu0 0.0
    %993 = vmatpush1.msra.mxu0 0.0
    %994 = vmatprep.subr.mxu0 0.0
    %995 = vmatpush1.msra.mxu0 0.0
    %996 = vmatprep.subr.mxu0 0.0
    %997 = vmatpush1.msra.mxu0 0.0
    %998 = vmatprep.subr.mxu0 0.0
    %999 = vmatpush1.msra.mxu0 0.0
    %1000 = vmatprep.subr.mxu0 0.0
    %1001 = vmatpush1.msra.mxu0 0.0
    %1002 = vmatprep.subr.mxu0 0.0
    %1003 = vmatpush1.msra.mxu0 0.0
    %1004 = vmatprep.subr.mxu0 0.0
    %1005 = vmatpush1.msra.mxu0 0.0
    %1006 = vmatprep.subr.mxu0 0.0
    %1007 = vmatpush1.msra.mxu0 0.0
    %1008 = vmatprep.subr.mxu0 0.0
    %1009 = vmatpush1.msra.mxu0 0.0
    %1010 = vmatprep.subr.mxu0 0.0
    %1011 = vmatpush1.msra.mxu0 0.0
    %1012 = vmatprep.mubr.f32.mxu0 0.0
    %1013 = vmatmul.mubr.f32.gmra.mrb[0].mxu0 %v946
    %v1014 = vpop.f32.mrb[0].mxu0
    %v1015 = vadd.f32 0.0, %v1014
    %v1016 = vpop.f32.mrb[0].mxu0
    %1017 = vdwg.mxu0
    %v1019 = vrot.slane %v1015, 6
    %v1021 = vadd.f32 %v153, %v1019
    %v1022 = vmul.f32 %v1021, 0.5
    %v1023 = vtanh.pop %v1022
    %v1024 = vadd.f32 %v1023, 1.0
    %v1025 = vmul.f32 %v1024, 0.5
    %1026 = vmatprep.subr.mxu0 0.0
    %1027 = vmatpush1.msra.mxu0 %v246
    %1028 = vmatprep.subr.mxu0 0.0
    %1029 = vmatpush1.msra.mxu0 %v247
    %1030 = vmatprep.subr.mxu0 0.0
    %1031 = vmatpush1.msra.mxu0 %v248
    %1032 = vmatprep.subr.mxu0 0.0
    %1033 = vmatpush1.msra.mxu0 %v249
    %1034 = vmatprep.subr.mxu0 0.0
    %1035 = vmatpush1.msra.mxu0 0.0
    %1036 = vmatprep.subr.mxu0 0.0
    %1037 = vmatpush1.msra.mxu0 0.0
    %1038 = vmatprep.subr.mxu0 0.0
    %1039 = vmatpush1.msra.mxu0 0.0
    %1040 = vmatprep.subr.mxu0 0.0
    %1041 = vmatpush1.msra.mxu0 0.0
    %1042 = vmatprep.subr.mxu0 0.0
    %1043 = vmatpush1.msra.mxu0 0.0
    %1044 = vmatprep.subr.mxu0 0.0
    %1045 = vmatpush1.msra.mxu0 0.0
    %1046 = vmatprep.subr.mxu0 0.0
    %1047 = vmatpush1.msra.mxu0 0.0
    %1048 = vmatprep.subr.mxu0 0.0
    %1049 = vmatpush1.msra.mxu0 0.0
    %1050 = vmatprep.subr.mxu0 0.0
    %1051 = vmatpush1.msra.mxu0 0.0
    %1052 = vmatprep.subr.mxu0 0.0
    %1053 = vmatpush1.msra.mxu0 0.0
    %1054 = vmatprep.subr.mxu0 0.0
    %1055 = vmatpush1.msra.mxu0 0.0
    %1056 = vmatprep.subr.mxu0 0.0
    %1057 = vmatpush1.msra.mxu0 0.0
    %1058 = vmatprep.subr.mxu0 0.0
    %1059 = vmatpush1.msra.mxu0 0.0
    %1060 = vmatprep.subr.mxu0 0.0
    %1061 = vmatpush1.msra.mxu0 0.0
    %1062 = vmatprep.subr.mxu0 0.0
    %1063 = vmatpush1.msra.mxu0 0.0
    %1064 = vmatprep.subr.mxu0 0.0
    %1065 = vmatpush1.msra.mxu0 0.0
    %1066 = vmatprep.subr.mxu0 0.0
    %1067 = vmatpush1.msra.mxu0 0.0
    %1068 = vmatprep.subr.mxu0 0.0
    %1069 = vmatpush1.msra.mxu0 0.0
    %1070 = vmatprep.subr.mxu0 0.0
    %1071 = vmatpush1.msra.mxu0 0.0
    %1072 = vmatprep.subr.mxu0 0.0
    %1073 = vmatpush1.msra.mxu0 0.0
    %1074 = vmatprep.subr.mxu0 0.0
    %1075 = vmatpush1.msra.mxu0 0.0
    %1076 = vmatprep.subr.mxu0 0.0
    %1077 = vmatpush1.msra.mxu0 0.0
    %1078 = vmatprep.subr.mxu0 0.0
    %1079 = vmatpush1.msra.mxu0 0.0
    %1080 = vmatprep.subr.mxu0 0.0
    %1081 = vmatpush1.msra.mxu0 0.0
    %1082 = vmatprep.subr.mxu0 0.0
    %1083 = vmatpush1.msra.mxu0 0.0
    %1084 = vmatprep.subr.mxu0 0.0
    %1085 = vmatpush1.msra.mxu0 0.0
    %1086 = vmatprep.subr.mxu0 0.0
    %1087 = vmatpush1.msra.mxu0 0.0
    %1088 = vmatprep.subr.mxu0 0.0
    %1089 = vmatpush1.msra.mxu0 0.0
    %1090 = vmatprep.mubr.f32.mxu0 0.0
    %1091 = vmatmul.mubr.f32.gmra.mrb[0].mxu0 %v946
    %v1092 = vpop.f32.mrb[0].mxu0
    %v1093 = vadd.f32 %v255, %v1092
    %v1094 = vpop.f32.mrb[0].mxu0
    %1095 = vdwg.mxu0
    %v1097 = vrot.slane %v1093, 6
    %v1099 = vmul.f32 %v1025, %v1097
    %v1100 = vadd.f32 %v239, %v1099
    %v1101 = vtanh.pop %v1100
    %v1102 = vsub.f32 1.0, %v1025
    %1104 = vrot.lane.b32.xlu0 %v1101, 32
    %v1105 = vpop.permute.xlu0 %1104
    %v1107 = vmul.f32 %v1102, %v1105
    %v1108 = vrot.slane %v942, 6
    %v1110 = vmul.f32 %v1025, %v1108
    %v1111 = vadd.f32 %v1107, %v1110
    %v1113 = vrot.slane %v1111, 2
    %1114 = vrot.lane.b32.xlu0 %v1113, 96
    %v1115 = vpop.permute.xlu0 %1114
    %v1116 = vsel %vm273, %v1115, 0
    %1118 = vmatprep.subr.mxu0 0.0
    %1119 = vmatpush1.msra.mxu0 %v242
    %1120 = vmatprep.subr.mxu0 0.0
    %1121 = vmatpush1.msra.mxu0 %v243
    %1122 = vmatprep.subr.mxu0 0.0
    %1123 = vmatpush1.msra.mxu0 %v244
    %1124 = vmatprep.subr.mxu0 0.0
    %1125 = vmatpush1.msra.mxu0 %v245
    %1126 = vmatprep.subr.mxu0 0.0
    %1127 = vmatpush1.msra.mxu0 0.0
    %1128 = vmatprep.subr.mxu0 0.0
    %1129 = vmatpush1.msra.mxu0 0.0
    %1130 = vmatprep.subr.mxu0 0.0
    %1131 = vmatpush1.msra.mxu0 0.0
    %1132 = vmatprep.subr.mxu0 0.0
    %1133 = vmatpush1.msra.mxu0 0.0
    %1134 = vmatprep.subr.mxu0 0.0
    %1135 = vmatpush1.msra.mxu0 0.0
    %1136 = vmatprep.subr.mxu0 0.0
    %1137 = vmatpush1.msra.mxu0 0.0
    %1138 = vmatprep.subr.mxu0 0.0
    %1139 = vmatpush1.msra.mxu0 0.0
    %1140 = vmatprep.subr.mxu0 0.0
    %1141 = vmatpush1.msra.mxu0 0.0
    %1142 = vmatprep.subr.mxu0 0.0
    %1143 = vmatpush1.msra.mxu0 0.0
    %1144 = vmatprep.subr.mxu0 0.0
    %1145 = vmatpush1.msra.mxu0 0.0
    %1146 = vmatprep.subr.mxu0 0.0
    %1147 = vmatpush1.msra.mxu0 0.0
    %1148 = vmatprep.subr.mxu0 0.0
    %1149 = vmatpush1.msra.mxu0 0.0
    %1150 = vmatprep.subr.mxu0 0.0
    %1151 = vmatpush1.msra.mxu0 0.0
    %1152 = vmatprep.subr.mxu0 0.0
    %1153 = vmatpush1.msra.mxu0 0.0
    %1154 = vmatprep.subr.mxu0 0.0
    %1155 = vmatpush1.msra.mxu0 0.0
    %1156 = vmatprep.subr.mxu0 0.0
    %1157 = vmatpush1.msra.mxu0 0.0
    %1158 = vmatprep.subr.mxu0 0.0
    %1159 = vmatpush1.msra.mxu0 0.0
    %1160 = vmatprep.subr.mxu0 0.0
    %1161 = vmatpush1.msra.mxu0 0.0
    %1162 = vmatprep.subr.mxu0 0.0
    %1163 = vmatpush1.msra.mxu0 0.0
    %1164 = vmatprep.subr.mxu0 0.0
    %1165 = vmatpush1.msra.mxu0 0.0
    %1166 = vmatprep.subr.mxu0 0.0
    %1167 = vmatpush1.msra.mxu0 0.0
    %1168 = vmatprep.subr.mxu0 0.0
    %1169 = vmatpush1.msra.mxu0 0.0
    %1170 = vmatprep.subr.mxu0 0.0
    %1171 = vmatpush1.msra.mxu0 0.0
    %1172 = vmatprep.subr.mxu0 0.0
    %1173 = vmatpush1.msra.mxu0 0.0
    %1174 = vmatprep.subr.mxu0 0.0
    %1175 = vmatpush1.msra.mxu0 0.0
    %1176 = vmatprep.subr.mxu0 0.0
    %1177 = vmatpush1.msra.mxu0 0.0
    %1178 = vmatprep.subr.mxu0 0.0
    %1179 = vmatpush1.msra.mxu0 0.0
    %1180 = vmatprep.subr.mxu0 0.0
    %1181 = vmatpush1.msra.mxu0 0.0
    %1182 = vmatprep.mubr.f32.mxu0 0.0
    %1183 = vmatmul.mubr.f32.gmra.mrb[0].mxu0 %v1116
    %v1184 = vpop.f32.mrb[0].mxu0
    %v1185 = vadd.f32 0.0, %v1184
    %v1186 = vpop.f32.mrb[0].mxu0
    %1187 = vdwg.mxu0
    %v1189 = vrot.slane %v1185, 4
    %v1191 = vadd.f32 %v153, %v1189
    %v1192 = vmul.f32 %v1191, 0.5
    %v1193 = vtanh.pop %v1192
    %v1194 = vadd.f32 %v1193, 1.0
    %v1195 = vmul.f32 %v1194, 0.5
    %1196 = vmatprep.subr.mxu0 0.0
    %1197 = vmatpush1.msra.mxu0 %v246
    %1198 = vmatprep.subr.mxu0 0.0
    %1199 = vmatpush1.msra.mxu0 %v247
    %1200 = vmatprep.subr.mxu0 0.0
    %1201 = vmatpush1.msra.mxu0 %v248
    %1202 = vmatprep.subr.mxu0 0.0
    %1203 = vmatpush1.msra.mxu0 %v249
    %1204 = vmatprep.subr.mxu0 0.0
    %1205 = vmatpush1.msra.mxu0 0.0
    %1206 = vmatprep.subr.mxu0 0.0
    %1207 = vmatpush1.msra.mxu0 0.0
    %1208 = vmatprep.subr.mxu0 0.0
    %1209 = vmatpush1.msra.mxu0 0.0
    %1210 = vmatprep.subr.mxu0 0.0
    %1211 = vmatpush1.msra.mxu0 0.0
    %1212 = vmatprep.subr.mxu0 0.0
    %1213 = vmatpush1.msra.mxu0 0.0
    %1214 = vmatprep.subr.mxu0 0.0
    %1215 = vmatpush1.msra.mxu0 0.0
    %1216 = vmatprep.subr.mxu0 0.0
    %1217 = vmatpush1.msra.mxu0 0.0
    %1218 = vmatprep.subr.mxu0 0.0
    %1219 = vmatpush1.msra.mxu0 0.0
    %1220 = vmatprep.subr.mxu0 0.0
    %1221 = vmatpush1.msra.mxu0 0.0
    %1222 = vmatprep.subr.mxu0 0.0
    %1223 = vmatpush1.msra.mxu0 0.0
    %1224 = vmatprep.subr.mxu0 0.0
    %1225 = vmatpush1.msra.mxu0 0.0
    %1226 = vmatprep.subr.mxu0 0.0
    %1227 = vmatpush1.msra.mxu0 0.0
    %1228 = vmatprep.subr.mxu0 0.0
    %1229 = vmatpush1.msra.mxu0 0.0
    %1230 = vmatprep.subr.mxu0 0.0
    %1231 = vmatpush1.msra.mxu0 0.0
    %1232 = vmatprep.subr.mxu0 0.0
    %1233 = vmatpush1.msra.mxu0 0.0
    %1234 = vmatprep.subr.mxu0 0.0
    %1235 = vmatpush1.msra.mxu0 0.0
    %1236 = vmatprep.subr.mxu0 0.0
    %1237 = vmatpush1.msra.mxu0 0.0
    %1238 = vmatprep.subr.mxu0 0.0
    %1239 = vmatpush1.msra.mxu0 0.0
    %1240 = vmatprep.subr.mxu0 0.0
    %1241 = vmatpush1.msra.mxu0 0.0
    %1242 = vmatprep.subr.mxu0 0.0
    %1243 = vmatpush1.msra.mxu0 0.0
    %1244 = vmatprep.subr.mxu0 0.0
    %1245 = vmatpush1.msra.mxu0 0.0
    %1246 = vmatprep.subr.mxu0 0.0
    %1247 = vmatpush1.msra.mxu0 0.0
    %1248 = vmatprep.subr.mxu0 0.0
    %1249 = vmatpush1.msra.mxu0 0.0
    %1250 = vmatprep.subr.mxu0 0.0
    %1251 = vmatpush1.msra.mxu0 0.0
    %1252 = vmatprep.subr.mxu0 0.0
    %1253 = vmatpush1.msra.mxu0 0.0
    %1254 = vmatprep.subr.mxu0 0.0
    %1255 = vmatpush1.msra.mxu0 0.0
    %1256 = vmatprep.subr.mxu0 0.0
    %1257 = vmatpush1.msra.mxu0 0.0
    %1258 = vmatprep.subr.mxu0 0.0
    %1259 = vmatpush1.msra.mxu0 0.0
    %1260 = vmatprep.mubr.f32.mxu0 0.0
    %1261 = vmatmul.mubr.f32.gmra.mrb[0].mxu0 %v1116
    %v1262 = vpop.f32.mrb[0].mxu0
    %v1263 = vadd.f32 %v255, %v1262
    %v1264 = vpop.f32.mrb[0].mxu0
    %1265 = vdwg.mxu0
    %v1267 = vrot.slane %v1263, 4
    %v1269 = vmul.f32 %v1195, %v1267
    %v1270 = vadd.f32 %v239, %v1269
    %v1271 = vtanh.pop %v1270
    %v1272 = vsub.f32 1.0, %v1195
    %1274 = vrot.lane.b32.xlu0 %v1271, 32
    %v1275 = vpop.permute.xlu0 %1274
    %v1277 = vmul.f32 %v1272, %v1275
    %v1278 = vrot.slane %v1111, 6
    %v1280 = vmul.f32 %v1195, %v1278
    %v1281 = vadd.f32 %v1277, %v1280
    %v1283 = vrot.slane %v1281, 4
    %1284 = vrot.lane.b32.xlu0 %v1283, 96
    %v1285 = vpop.permute.xlu0 %1284
    %v1286 = vsel %vm273, %v1285, 0
    %1288 = vmatprep.subr.mxu0 0.0
    %1289 = vmatpush1.msra.mxu0 %v242
    %1290 = vmatprep.subr.mxu0 0.0
    %1291 = vmatpush1.msra.mxu0 %v243
    %1292 = vmatprep.subr.mxu0 0.0
    %1293 = vmatpush1.msra.mxu0 %v244
    %1294 = vmatprep.subr.mxu0 0.0
    %1295 = vmatpush1.msra.mxu0 %v245
    %1296 = vmatprep.subr.mxu0 0.0
    %1297 = vmatpush1.msra.mxu0 0.0
    %1298 = vmatprep.subr.mxu0 0.0
    %1299 = vmatpush1.msra.mxu0 0.0
    %1300 = vmatprep.subr.mxu0 0.0
    %1301 = vmatpush1.msra.mxu0 0.0
    %1302 = vmatprep.subr.mxu0 0.0
    %1303 = vmatpush1.msra.mxu0 0.0
    %1304 = vmatprep.subr.mxu0 0.0
    %1305 = vmatpush1.msra.mxu0 0.0
    %1306 = vmatprep.subr.mxu0 0.0
    %1307 = vmatpush1.msra.mxu0 0.0
    %1308 = vmatprep.subr.mxu0 0.0
    %1309 = vmatpush1.msra.mxu0 0.0
    %1310 = vmatprep.subr.mxu0 0.0
    %1311 = vmatpush1.msra.mxu0 0.0
    %1312 = vmatprep.subr.mxu0 0.0
    %1313 = vmatpush1.msra.mxu0 0.0
    %1314 = vmatprep.subr.mxu0 0.0
    %1315 = vmatpush1.msra.mxu0 0.0
    %1316 = vmatprep.subr.mxu0 0.0
    %1317 = vmatpush1.msra.mxu0 0.0
    %1318 = vmatprep.subr.mxu0 0.0
    %1319 = vmatpush1.msra.mxu0 0.0
    %1320 = vmatprep.subr.mxu0 0.0
    %1321 = vmatpush1.msra.mxu0 0.0
    %1322 = vmatprep.subr.mxu0 0.0
    %1323 = vmatpush1.msra.mxu0 0.0
    %1324 = vmatprep.subr.mxu0 0.0
    %1325 = vmatpush1.msra.mxu0 0.0
    %1326 = vmatprep.subr.mxu0 0.0
    %1327 = vmatpush1.msra.mxu0 0.0
    %1328 = vmatprep.subr.mxu0 0.0
    %1329 = vmatpush1.msra.mxu0 0.0
    %1330 = vmatprep.subr.mxu0 0.0
    %1331 = vmatpush1.msra.mxu0 0.0
    %1332 = vmatprep.subr.mxu0 0.0
    %1333 = vmatpush1.msra.mxu0 0.0
    %1334 = vmatprep.subr.mxu0 0.0
    %1335 = vmatpush1.msra.mxu0 0.0
    %1336 = vmatprep.subr.mxu0 0.0
    %1337 = vmatpush1.msra.mxu0 0.0
    %1338 = vmatprep.subr.mxu0 0.0
    %1339 = vmatpush1.msra.mxu0 0.0
    %1340 = vmatprep.subr.mxu0 0.0
    %1341 = vmatpush1.msra.mxu0 0.0
    %1342 = vmatprep.subr.mxu0 0.0
    %1343 = vmatpush1.msra.mxu0 0.0
    %1344 = vmatprep.subr.mxu0 0.0
    %1345 = vmatpush1.msra.mxu0 0.0
    %1346 = vmatprep.subr.mxu0 0.0
    %1347 = vmatpush1.msra.mxu0 0.0
    %1348 = vmatprep.subr.mxu0 0.0
    %1349 = vmatpush1.msra.mxu0 0.0
    %1350 = vmatprep.subr.mxu0 0.0
    %1351 = vmatpush1.msra.mxu0 0.0
    %1352 = vmatprep.mubr.f32.mxu0 0.0
    %1353 = vmatmul.mubr.f32.gmra.mrb[0].mxu0 %v1286
    %v1354 = vpop.f32.mrb[0].mxu0
    %v1355 = vadd.f32 0.0, %v1354
    %v1356 = vpop.f32.mrb[0].mxu0
    %1357 = vdwg.mxu0
    %v1359 = vrot.slane %v1355, 2
    %v1361 = vadd.f32 %v153, %v1359
    %v1362 = vmul.f32 %v1361, 0.5
    %v1363 = vtanh.pop %v1362
    %v1364 = vadd.f32 %v1363, 1.0
    %v1365 = vmul.f32 %v1364, 0.5
    %1366 = vmatprep.subr.mxu0 0.0
    %1367 = vmatpush1.msra.mxu0 %v246
    %1368 = vmatprep.subr.mxu0 0.0
    %1369 = vmatpush1.msra.mxu0 %v247
    %1370 = vmatprep.subr.mxu0 0.0
    %1371 = vmatpush1.msra.mxu0 %v248
    %1372 = vmatprep.subr.mxu0 0.0
    %1373 = vmatpush1.msra.mxu0 %v249
    %1374 = vmatprep.subr.mxu0 0.0
    %1375 = vmatpush1.msra.mxu0 0.0
    %1376 = vmatprep.subr.mxu0 0.0
    %1377 = vmatpush1.msra.mxu0 0.0
    %1378 = vmatprep.subr.mxu0 0.0
    %1379 = vmatpush1.msra.mxu0 0.0
    %1380 = vmatprep.subr.mxu0 0.0
    %1381 = vmatpush1.msra.mxu0 0.0
    %1382 = vmatprep.subr.mxu0 0.0
    %1383 = vmatpush1.msra.mxu0 0.0
    %1384 = vmatprep.subr.mxu0 0.0
    %1385 = vmatpush1.msra.mxu0 0.0
    %1386 = vmatprep.subr.mxu0 0.0
    %1387 = vmatpush1.msra.mxu0 0.0
    %1388 = vmatprep.subr.mxu0 0.0
    %1389 = vmatpush1.msra.mxu0 0.0
    %1390 = vmatprep.subr.mxu0 0.0
    %1391 = vmatpush1.msra.mxu0 0.0
    %1392 = vmatprep.subr.mxu0 0.0
    %1393 = vmatpush1.msra.mxu0 0.0
    %1394 = vmatprep.subr.mxu0 0.0
    %1395 = vmatpush1.msra.mxu0 0.0
    %1396 = vmatprep.subr.mxu0 0.0
    %1397 = vmatpush1.msra.mxu0 0.0
    %1398 = vmatprep.subr.mxu0 0.0
    %1399 = vmatpush1.msra.mxu0 0.0
    %1400 = vmatprep.subr.mxu0 0.0
    %1401 = vmatpush1.msra.mxu0 0.0
    %1402 = vmatprep.subr.mxu0 0.0
    %1403 = vmatpush1.msra.mxu0 0.0
    %1404 = vmatprep.subr.mxu0 0.0
    %1405 = vmatpush1.msra.mxu0 0.0
    %1406 = vmatprep.subr.mxu0 0.0
    %1407 = vmatpush1.msra.mxu0 0.0
    %1408 = vmatprep.subr.mxu0 0.0
    %1409 = vmatpush1.msra.mxu0 0.0
    %1410 = vmatprep.subr.mxu0 0.0
    %1411 = vmatpush1.msra.mxu0 0.0
    %1412 = vmatprep.subr.mxu0 0.0
    %1413 = vmatpush1.msra.mxu0 0.0
    %1414 = vmatprep.subr.mxu0 0.0
    %1415 = vmatpush1.msra.mxu0 0.0
    %1416 = vmatprep.subr.mxu0 0.0
    %1417 = vmatpush1.msra.mxu0 0.0
    %1418 = vmatprep.subr.mxu0 0.0
    %1419 = vmatpush1.msra.mxu0 0.0
    %1420 = vmatprep.subr.mxu0 0.0
    %1421 = vmatpush1.msra.mxu0 0.0
    %1422 = vmatprep.subr.mxu0 0.0
    %1423 = vmatpush1.msra.mxu0 0.0
    %1424 = vmatprep.subr.mxu0 0.0
    %1425 = vmatpush1.msra.mxu0 0.0
    %1426 = vmatprep.subr.mxu0 0.0
    %1427 = vmatpush1.msra.mxu0 0.0
    %1428 = vmatprep.subr.mxu0 0.0
    %1429 = vmatpush1.msra.mxu0 0.0
    %1430 = vmatprep.mubr.f32.mxu0 0.0
    %1431 = vmatmul.mubr.f32.gmra.mrb[0].mxu0 %v1286
    %v1432 = vpop.f32.mrb[0].mxu0
    %v1433 = vadd.f32 %v255, %v1432
    %v1434 = vpop.f32.mrb[0].mxu0
    %1435 = vdwg.mxu0
    %v1437 = vrot.slane %v1433, 2
    %v1439 = vmul.f32 %v1365, %v1437
    %v1440 = vadd.f32 %v239, %v1439
    %v1441 = vtanh.pop %v1440
    %v1442 = vsub.f32 1.0, %v1365
    %1444 = vrot.lane.b32.xlu0 %v1441, 32
    %v1445 = vpop.permute.xlu0 %1444
    %v1447 = vmul.f32 %v1442, %v1445
    %v1448 = vrot.slane %v1281, 6
    %v1450 = vmul.f32 %v1365, %v1448
    %v1451 = vadd.f32 %v1447, %v1450
    %v1452 = vld [vmem:[%s8] sm:$0xff]
    %v1453 = vld [vmem:[%s8 + $0x8] sm:$0xff]
    %v1454 = vld [vmem:[%s8 + $0x10] sm:$0xff]
    %v1455 = vld [vmem:[%s8 + $0x18] sm:$0xff]
    %v1456 = vld [vmem:[%s9] sm:$0x1]
    %v1458 = vlaneseq
    %v1459 = vshrl.u32 %v1458, 7
    %v1460 = vsub.s32 0, %v1459
    %v1461 = vrot.slane %v1456, %v1460
    %v1464 = vrot.slane %v1451, 6
    %1465 = vrot.lane.b32.xlu0 %v1464, 96
    %v1466 = vpop.permute.xlu0 %1465
    %v1467 = vsel %vm273, %v1466, 0
    %1469 = vmatprep.subr.mxu0 0.0
    %1470 = vmatpush1.msra.mxu0 %v1452
    %1471 = vmatprep.subr.mxu0 0.0
    %1472 = vmatpush1.msra.mxu0 %v1453
    %1473 = vmatprep.subr.mxu0 0.0
    %1474 = vmatpush1.msra.mxu0 %v1454
    %1475 = vmatprep.subr.mxu0 0.0
    %1476 = vmatpush1.msra.mxu0 %v1455
    %1477 = vmatprep.subr.mxu0 0.0
    %1478 = vmatpush1.msra.mxu0 0.0
    %1479 = vmatprep.subr.mxu0 0.0
    %1480 = vmatpush1.msra.mxu0 0.0
    %1481 = vmatprep.subr.mxu0 0.0
    %1482 = vmatpush1.msra.mxu0 0.0
    %1483 = vmatprep.subr.mxu0 0.0
    %1484 = vmatpush1.msra.mxu0 0.0
    %1485 = vmatprep.subr.mxu0 0.0
    %1486 = vmatpush1.msra.mxu0 0.0
    %1487 = vmatprep.subr.mxu0 0.0
    %1488 = vmatpush1.msra.mxu0 0.0
    %1489 = vmatprep.subr.mxu0 0.0
    %1490 = vmatpush1.msra.mxu0 0.0
    %1491 = vmatprep.subr.mxu0 0.0
    %1492 = vmatpush1.msra.mxu0 0.0
    %1493 = vmatprep.subr.mxu0 0.0
    %1494 = vmatpush1.msra.mxu0 0.0
    %1495 = vmatprep.subr.mxu0 0.0
    %1496 = vmatpush1.msra.mxu0 0.0
    %1497 = vmatprep.subr.mxu0 0.0
    %1498 = vmatpush1.msra.mxu0 0.0
    %1499 = vmatprep.subr.mxu0 0.0
    %1500 = vmatpush1.msra.mxu0 0.0
    %1501 = vmatprep.subr.mxu0 0.0
    %1502 = vmatpush1.msra.mxu0 0.0
    %1503 = vmatprep.subr.mxu0 0.0
    %1504 = vmatpush1.msra.mxu0 0.0
    %1505 = vmatprep.subr.mxu0 0.0
    %1506 = vmatpush1.msra.mxu0 0.0
    %1507 = vmatprep.subr.mxu0 0.0
    %1508 = vmatpush1.msra.mxu0 0.0
    %1509 = vmatprep.subr.mxu0 0.0
    %1510 = vmatpush1.msra.mxu0 0.0
    %1511 = vmatprep.subr.mxu0 0.0
    %1512 = vmatpush1.msra.mxu0 0.0
    %1513 = vmatprep.subr.mxu0 0.0
    %1514 = vmatpush1.msra.mxu0 0.0
    %1515 = vmatprep.subr.mxu0 0.0
    %1516 = vmatpush1.msra.mxu0 0.0
    %1517 = vmatprep.subr.mxu0 0.0
    %1518 = vmatpush1.msra.mxu0 0.0
    %1519 = vmatprep.subr.mxu0 0.0
    %1520 = vmatpush1.msra.mxu0 0.0
    %1521 = vmatprep.subr.mxu0 0.0
    %1522 = vmatpush1.msra.mxu0 0.0
    %1523 = vmatprep.subr.mxu0 0.0
    %1524 = vmatpush1.msra.mxu0 0.0
    %1525 = vmatprep.subr.mxu0 0.0
    %1526 = vmatpush1.msra.mxu0 0.0
    %1527 = vmatprep.subr.mxu0 0.0
    %1528 = vmatpush1.msra.mxu0 0.0
    %1529 = vmatprep.subr.mxu0 0.0
    %1530 = vmatpush1.msra.mxu0 0.0
    %1531 = vmatprep.subr.mxu0 0.0
    %1532 = vmatpush1.msra.mxu0 0.0
    %1533 = vmatprep.mubr.f32.mxu0 0.0
    %1534 = vmatmul.mubr.f32.gmra.mrb[0].mxu0 %v1467
    %v1535 = vpop.f32.mrb[0].mxu0
    %v1536 = vadd.f32 %v1461, %v1535
    %v1537 = vpop.f32.mrb[0].mxu0
    %1538 = vdwg.mxu0
    %vm1539 = vcmask 9216
    %1540 = vst.msk [vmem:[#allocation7] sm:$0x3] %vm1539, %v1536
    // Predicated region
    $region50: #{tpu_custom_call.1} parent=1 // pred_check
      _
    $region51: #{tpu_custom_call.1} parent=1 // pred_check_branch
      %1542 = sbr.rel (0) target = $region53
    $region52: #{tpu_custom_call.1} parent=1 // pred_region
      %s1544 = ssub.s32 32, 32
      %1545 = vsyncadd [#allocation4], %s1544
      %s1547 = sshll.u32 [#allocation7], 4
      %s1548 = int_to_ptr.vmem [resolvable:$true] %s1547
      %1550 = dma.vmem_to_hbm [thread:$0]  %s1548, 32, %s10, [#allocation4]
    $region53: #{tpu_custom_call.1} parent=1 // pred_fallthru
      _
    // Predicated region
    $region54: #{tpu_custom_call.1} parent=1 // pred_check
      _
    $region55: #{tpu_custom_call.1} parent=1 // pred_check_branch
      %1552 = sbr.rel (0) target = $region57
    $region56: #{tpu_custom_call.1} parent=1 // pred_region
      %1553 = dma.done [#allocation4], 32
    $region57: #{tpu_custom_call.1} parent=1 // pred_fallthru
      _
    %1554 = vsyncpa [#allocation3], 1
    %1555 = vsyncpa [#allocation6], 1
    %1556 = vsyncpa [#allocation4], 1

</llo_original>
